<compile_context>
chip_gen: v7x
topology: tpu7x:2x2x1
jax: 0.10.0
libtpu: 0.0.40
codegen_flags: <defaults>
</compile_context>

<pallas_src>
import functools
import math

import jax
import jax.numpy as jnp
from jax.experimental import pallas as pl
from jax.experimental.pallas import tpu as pltpu


# ----------------------------- GELU variants ------------------------------

_SQRT_2_OVER_PI = math.sqrt(2.0 / math.pi)
_INV_SQRT2 = 1.0 / math.sqrt(2.0)


def _gelu_erf(x):
    # PyTorch nn.GELU() default (exact erf form).
    return 0.5 * x * (1.0 + jax.lax.erf(x * _INV_SQRT2))


def _gelu_tanh(x):
    # tanh approximation — routes through the EUP slot (v5e has no bf16 VPU
    # and the erf polynomial would land on the binding VALU slots).
    return 0.5 * x * (1.0 + jnp.tanh(_SQRT_2_OVER_PI * (x + 0.044715 * x * x * x)))


def _device_kind():
    try:
        return jax.devices()[0].device_kind.lower()
    except Exception:
        return ""


def _use_tanh_gelu():
    k = _device_kind()
    return ("v5 lite" in k) or ("v5e" in k) or ("v5lite" in k)


def _pick_num_steps(batch, n_tok):
    """1 step (whole batch) on single-TC chips; 2 parallel steps on v7x."""
    k = _device_kind()
    if ("v7" in k or "7x" in k) and batch % 2 == 0 and ((batch // 2) * n_tok) % 8 == 0:
        return 2
    return 1


# ------------------------------- the kernel -------------------------------

def _mask_predictor_kernel(
    x_ref,     # (R, Din)      f32  — R = Bb * N rows (whole batch elements)
    ln_ref,    # (2, Din)      f32  — row0 = LN weight, row1 = LN bias
    w1_ref,    # (Din, H)      bf16
    w2_ref,    # (2, H, H//2)  bf16 — [0]=local half (rows H//2: zeroed),
               #                       [1]=global half (rows :H//2 zeroed, *1/N)
    w3_ref,    # (H//2, H//4)  bf16
    b_ref,     # (5, H)        f32  — rows: b1, b2(pad), b3(pad), w4(pad), [b4,0..]
    out_ref,   # (8, R)        f32  — lane-dense row, replicated over 8 sublanes
    *,
    bb,
    n_tok,
    h_dim,
    tanh_gelu,
):
    half = h_dim // 2
    hq = h_dim // 4
    r = bb * n_tok
    gelu = _gelu_tanh if tanh_gelu else _gelu_erf

    x = x_ref[...].astype(jnp.float32)                     # (R, Din)
    ln = ln_ref[...]                                       # (2, Din)
    bias = b_ref[...]                                      # (5, H)

    # ---- layer1: LayerNorm -> Linear(in_dim, h_dim) -> GELU ----
    mean = jnp.mean(x, axis=-1, keepdims=True)
    var = jnp.mean(jnp.square(x - mean), axis=-1, keepdims=True)
    xn = (x - mean) * jax.lax.rsqrt(var + 1e-5)
    xn = xn * ln[0:1, :] + ln[1:2, :]

    z = jnp.dot(xn.astype(jnp.bfloat16), w1_ref[...],
                preferred_element_type=jnp.float32) + bias[0:1, :]
    z = gelu(z)                                            # (R, H) f32
    zb = z.astype(jnp.bfloat16)

    # ---- layer2 first Linear, with local / global(mean) split ----
    # concat([z_local, mean_tok(z_global)]) @ W2
    #   == z @ W2_local_zeropad + (sum_tok(z) @ (W2_global_zeropad / N))
    local = jnp.dot(zb, w2_ref[0], preferred_element_type=jnp.float32)  # (R, half)

    # per-batch token sum in f32 (small sublane reduction, no (R,R) matmul);
    # the 1/N is already folded into w2_ref[1] by the wrapper.
    zsum = jnp.sum(z.reshape(bb, n_tok, h_dim), axis=1)    # (Bb, H) f32
    globp = jnp.dot(zsum.astype(jnp.bfloat16), w2_ref[1],
                    preferred_element_type=jnp.float32)     # (Bb, half)

    h1 = gelu(local.reshape(bb, n_tok, half)
              + globp[:, None, :]                          # broadcast over tokens
              + bias[1:2, :half])                          # (Bb, N, half)

    # ---- layer2 second Linear + GELU ----
    h2 = jnp.dot(h1.reshape(r, half).astype(jnp.bfloat16), w3_ref[...],
                 preferred_element_type=jnp.float32) + bias[2:3, :hq]
    h2 = gelu(h2)                                          # (R, hq) f32

    # ---- final (H//4 -> 1) projection, emitted lane-dense as a (1, R) row:
    #      w4_row @ h2^T on the MXU (rhs transpose via the idle XLU slot) ----
    w4row = bias[3:4, :hq].astype(jnp.bfloat16)            # (1, hq)
    outrow = jnp.dot(w4row, h2.astype(jnp.bfloat16).T,
                     preferred_element_type=jnp.float32)    # (1, R)
    outrow = outrow + bias[4:5, 0:1]                        # + b4
    # replicate over 8 sublanes -> full unmasked vector stores
    out_ref[...] = jnp.broadcast_to(outrow, (8, r)).astype(out_ref.dtype)


# ------------------------------- wrappers ----------------------------------

def prepare_params(params, n_tok):
    """One-time weight preprocessing (do NOT run per call)."""
    (ln_w, ln_b, w1, b1, w2, b2, w3, b3, w4, b4) = params
    H = w1.shape[1]
    half, hq = H // 2, H // 4

    ln_wb = jnp.stack([ln_w.reshape(-1), ln_b.reshape(-1)], 0).astype(jnp.float32)

    # split w2 into zero-padded local/global halves; fold 1/N into the global
    # half so the kernel never scales and never slices along lanes.
    w2_loc = jnp.concatenate([w2[:half, :], jnp.zeros_like(w2[half:, :])], 0)
    w2_glob = jnp.concatenate(
        [jnp.zeros_like(w2[:half, :]), w2[half:, :] * (1.0 / n_tok)], 0)
    w2_pair = jnp.stack([w2_loc, w2_glob], 0).astype(jnp.bfloat16)   # (2, H, half)

    b_pack = jnp.zeros((5, H), jnp.float32)
    b_pack = b_pack.at[0, :H].set(b1.reshape(-1))
    b_pack = b_pack.at[1, :half].set(b2.reshape(-1))
    b_pack = b_pack.at[2, :hq].set(b3.reshape(-1))
    b_pack = b_pack.at[3, :hq].set(w4.reshape(-1))
    b_pack = b_pack.at[4, 0].set(b4.reshape(-1)[0])

    return (ln_wb, w1.astype(jnp.bfloat16), w2_pair, w3.astype(jnp.bfloat16), b_pack)


def mask_predictor(x, prepared):
    """x: (B, N, in_dim) f32, prepared = prepare_params(...) -> (B, N, 1) f32."""
    B, N, Din = x.shape
    ln_wb, w1, w2_pair, w3, b_pack = prepared
    H = w1.shape[1]

    num_steps = _pick_num_steps(B, N)
    Bb = B // num_steps
    R = Bb * N
    x2 = x.reshape(B * N, Din)

    kernel = functools.partial(
        _mask_predictor_kernel, bb=Bb, n_tok=N, h_dim=H, tanh_gelu=_use_tanh_gelu())

    weight_list = [ln_wb, w1, w2_pair, w3, b_pack]
    # Constant index maps: these blocks are only DMA'd on the first grid step.
    weight_specs = [
        pl.BlockSpec(w.shape, lambda i, nd=w.ndim: (0,) * nd) for w in weight_list
    ]

    out_pad = pl.pallas_call(
        kernel,
        out_shape=jax.ShapeDtypeStruct((num_steps * 8, R), jnp.float32),
        grid_spec=pltpu.PrefetchScalarGridSpec(
            num_scalar_prefetch=0,
            grid=(num_steps,),
            in_specs=[pl.BlockSpec((R, Din), lambda i: (i, 0))] + weight_specs,
            out_specs=pl.BlockSpec((8, R), lambda i: (i, 0)),
        ),
        compiler_params=pltpu.CompilerParams(
            dimension_semantics=("parallel",),   # shards the 2 steps across TCs on v7x
        ),
    )(x2, *weight_list)

    # strip the 8x sublane replication, restore (B, N, 1)
    return out_pad.reshape(num_steps, 8, R)[:, 0, :].reshape(B, N, 1)


def mask_predictor_ref(x, params):
    """Pure-JAX f32 reference mirroring the PyTorch forward exactly."""
    (ln_w, ln_b, w1, b1, w2, b2, w3, b3, w4, b4) = params
    mean = jnp.mean(x, axis=-1, keepdims=True)
    var = jnp.mean((x - mean) ** 2, axis=-1, keepdims=True)
    xn = (x - mean) / jnp.sqrt(var + 1e-5) * ln_w + ln_b
    z = _gelu_erf(xn @ w1 + b1)
    half = z.shape[-1] // 2
    z_local, z_global = z[..., :half], z[..., half:]
    z_global = jnp.broadcast_to(
        jnp.mean(z_global, axis=1, keepdims=True), z_local.shape)
    zc = jnp.concatenate([z_local, z_global], axis=-1)
    h1 = _gelu_erf(zc @ w2 + b2)
    h2 = _gelu_erf(h1 @ w3 + b3)
    return h2 @ w4 + b4


def make_params(key, in_dim, h_dim):
    """Deterministic synthetic parameters (PyTorch-default-like init).

    Linear weights are stored already transposed as (fan_in, fan_out) so the
    kernel computes y = x @ W + b (same math as torch's x @ W.T + b)."""
    ks = jax.random.split(key, 4)

    def lin(k, fan_in, fan_out):
        bound = 1.0 / math.sqrt(fan_in)
        kw, kb = jax.random.split(k)
        w = jax.random.uniform(kw, (fan_in, fan_out), jnp.float32, -bound, bound)
        b = jax.random.uniform(kb, (1, fan_out), jnp.float32, -bound, bound)
        return w, b

    ln_w = jnp.ones((1, in_dim), jnp.float32)
    ln_b = jnp.zeros((1, in_dim), jnp.float32)
    w1, b1 = lin(ks[0], in_dim, h_dim)
    w2, b2 = lin(ks[1], h_dim, h_dim // 2)
    w3, b3 = lin(ks[2], h_dim // 2, h_dim // 4)
    w4, b4 = lin(ks[3], h_dim // 4, 1)
    return (ln_w, ln_b, w1, b1, w2, b2, w3, b3, w4, b4)


if __name__ == "__main__":
    B, N, IN_DIM, H_DIM = 32, 8, 32, 32

    key = jax.random.PRNGKey(0)
    kx, kp = jax.random.split(key)
    x = jax.random.normal(kx, (B, N, IN_DIM), jnp.float32)
    params = make_params(kp, IN_DIM, H_DIM)

    prepared = prepare_params(params, N)          # one-time weight prep
    fwd = jax.jit(mask_predictor)

    out = jax.block_until_ready(fwd(x, prepared))
    ref = mask_predictor_ref(x, params)

    assert out.shape == (B, N, 1)
    max_err = float(jnp.max(jnp.abs(out - ref)))
    # bf16 MXU operands with f32 accumulation (and tanh-GELU on v5e)
    # -> slightly looser tolerance than pure f32.
    assert jnp.allclose(out, ref, atol=2e-2, rtol=2e-2), max_err
    print("KERNEL_OK")
</pallas_src>

<mosaic_0001>
module attributes {stable_mosaic.version = 11 : i64} {
  func.func @_mask_predictor_kernel(%arg0: i32, %arg1: memref<256x32xf32, #tpu.memory_space<vmem>>, %arg2: memref<2x32xf32, #tpu.memory_space<vmem>>, %arg3: memref<32x32xbf16, #tpu.memory_space<vmem>>, %arg4: memref<2x32x16xbf16, #tpu.memory_space<vmem>>, %arg5: memref<16x8xbf16, #tpu.memory_space<vmem>>, %arg6: memref<5x32xf32, #tpu.memory_space<vmem>>, %arg7: memref<8x256xf32, #tpu.memory_space<vmem>>) attributes {dimension_semantics = [#tpu.dimension_semantics<parallel>], iteration_bounds = array<i64: 1>, scalar_prefetch = 0 : i64, scratch_operands = 0 : i64, tpu.core_type = #tpu.core_type<tc>, window_params = [{transform_indices = @transform_0, window_bounds = array<i64: 256, 32>}, {pipeline_mode = #tpu.pipeline_mode<synchronous>, transform_indices = @transform_1, window_bounds = array<i64: 2, 32>}, {pipeline_mode = #tpu.pipeline_mode<synchronous>, transform_indices = @transform_2, window_bounds = array<i64: 32, 32>}, {pipeline_mode = #tpu.pipeline_mode<synchronous>, transform_indices = @transform_3, window_bounds = array<i64: 2, 32, 16>}, {pipeline_mode = #tpu.pipeline_mode<synchronous>, transform_indices = @transform_4, window_bounds = array<i64: 16, 8>}, {pipeline_mode = #tpu.pipeline_mode<synchronous>, transform_indices = @transform_5, window_bounds = array<i64: 5, 32>}, {transform_indices = @transform_6, window_bounds = array<i64: 8, 256>}]} {
    %c0 = arith.constant 0 : index
    %c0_0 = arith.constant 0 : index
    %0 = vector.load %arg1[%c0, %c0_0] : memref<256x32xf32, #tpu.memory_space<vmem>>, vector<256x32xf32>
    %c0_1 = arith.constant 0 : index
    %c0_2 = arith.constant 0 : index
    %1 = vector.load %arg2[%c0_1, %c0_2] : memref<2x32xf32, #tpu.memory_space<vmem>>, vector<2x32xf32>
    %c0_3 = arith.constant 0 : index
    %c0_4 = arith.constant 0 : index
    %2 = vector.load %arg6[%c0_3, %c0_4] : memref<5x32xf32, #tpu.memory_space<vmem>>, vector<5x32xf32>
    %cst = arith.constant dense<0.000000e+00> : vector<256xf32>
    %3 = vector.multi_reduction <add>, %0, %cst [1] : vector<256x32xf32> to vector<256xf32>
    %4 = vector.shape_cast %3 : vector<256xf32> to vector<256x1xf32>
    %cst_5 = arith.constant 3.200000e+01 : f32
    %5 = vector.broadcast %cst_5 : f32 to vector<256x1xf32>
    %6 = arith.divf %4, %5 : vector<256x1xf32>
    %7 = vector.broadcast %6 : vector<256x1xf32> to vector<256x32xf32>
    %8 = arith.subf %0, %7 : vector<256x32xf32>
    %9 = arith.mulf %8, %8 : vector<256x32xf32>
    %cst_6 = arith.constant dense<0.000000e+00> : vector<256xf32>
    %10 = vector.multi_reduction <add>, %9, %cst_6 [1] : vector<256x32xf32> to vector<256xf32>
    %11 = vector.shape_cast %10 : vector<256xf32> to vector<256x1xf32>
    %cst_7 = arith.constant 3.200000e+01 : f32
    %12 = vector.broadcast %cst_7 : f32 to vector<256x1xf32>
    %13 = arith.divf %11, %12 : vector<256x1xf32>
    %14 = vector.broadcast %6 : vector<256x1xf32> to vector<256x32xf32>
    %15 = arith.subf %0, %14 : vector<256x32xf32>
    %cst_8 = arith.constant 9.99999974E-6 : f32
    %16 = vector.broadcast %cst_8 : f32 to vector<256x1xf32>
    %17 = arith.addf %13, %16 : vector<256x1xf32>
    %18 = math.rsqrt %17 : vector<256x1xf32>
    %19 = vector.broadcast %18 : vector<256x1xf32> to vector<256x32xf32>
    %20 = arith.mulf %15, %19 : vector<256x32xf32>
    %21 = vector.extract_strided_slice %1 {offsets = [0, 0], sizes = [1, 32], strides = [1, 1]} : vector<2x32xf32> to vector<1x32xf32>
    %22 = vector.broadcast %21 : vector<1x32xf32> to vector<256x32xf32>
    %23 = arith.mulf %20, %22 : vector<256x32xf32>
    %24 = vector.extract_strided_slice %1 {offsets = [1, 0], sizes = [1, 32], strides = [1, 1]} : vector<2x32xf32> to vector<1x32xf32>
    %25 = vector.broadcast %24 : vector<1x32xf32> to vector<256x32xf32>
    %26 = arith.addf %23, %25 : vector<256x32xf32>
    %27 = arith.truncf %26 : vector<256x32xf32> to vector<256x32xbf16>
    %c0_9 = arith.constant 0 : index
    %c0_10 = arith.constant 0 : index
    %28 = vector.load %arg3[%c0_9, %c0_10] : memref<32x32xbf16, #tpu.memory_space<vmem>>, vector<32x32xbf16>
    %cst_11 = arith.constant dense<0.000000e+00> : vector<256x32xf32>
    %29 = tpu.matmul %27, %28, %cst_11 {dimension_numbers = #tpu.dot_dimension_numbers<[1], [0], [0], [1], [0, 0, 1, 1], [], []>} : vector<256x32xbf16>, vector<32x32xbf16>, vector<256x32xf32> -> vector<256x32xf32>
    %30 = vector.extract_strided_slice %2 {offsets = [0, 0], sizes = [1, 32], strides = [1, 1]} : vector<5x32xf32> to vector<1x32xf32>
    %31 = vector.broadcast %30 : vector<1x32xf32> to vector<256x32xf32>
    %32 = arith.addf %29, %31 : vector<256x32xf32>
    %cst_12 = arith.constant 5.000000e-01 : f32
    %33 = vector.broadcast %cst_12 : f32 to vector<256x32xf32>
    %34 = arith.mulf %33, %32 : vector<256x32xf32>
    %cst_13 = arith.constant 0.707106769 : f32
    %35 = vector.broadcast %cst_13 : f32 to vector<256x32xf32>
    %36 = arith.mulf %32, %35 : vector<256x32xf32>
    %37 = math.erf %36 : vector<256x32xf32>
    %cst_14 = arith.constant 1.000000e+00 : f32
    %38 = vector.broadcast %cst_14 : f32 to vector<256x32xf32>
    %39 = arith.addf %38, %37 : vector<256x32xf32>
    %40 = arith.mulf %34, %39 : vector<256x32xf32>
    %41 = arith.truncf %40 : vector<256x32xf32> to vector<256x32xbf16>
    %c0_15 = arith.constant 0 : index
    %c0_16 = arith.constant 0 : index
    %c0_17 = arith.constant 0 : index
    %42 = vector.load %arg4[%c0_15, %c0_16, %c0_17] : memref<2x32x16xbf16, #tpu.memory_space<vmem>>, vector<1x32x16xbf16>
    %43 = vector.shape_cast %42 : vector<1x32x16xbf16> to vector<32x16xbf16>
    %cst_18 = arith.constant dense<0.000000e+00> : vector<256x16xf32>
    %44 = tpu.matmul %41, %43, %cst_18 {dimension_numbers = #tpu.dot_dimension_numbers<[1], [0], [0], [1], [0, 0, 1, 1], [], []>} : vector<256x32xbf16>, vector<32x16xbf16>, vector<256x16xf32> -> vector<256x16xf32>
    %45 = vector.shape_cast %40 : vector<256x32xf32> to vector<32x8x32xf32>
    %cst_19 = arith.constant dense<0.000000e+00> : vector<32x32xf32>
    %46 = vector.multi_reduction <add>, %45, %cst_19 [1] : vector<32x8x32xf32> to vector<32x32xf32>
    %47 = arith.truncf %46 : vector<32x32xf32> to vector<32x32xbf16>
    %c1 = arith.constant 1 : index
    %c0_20 = arith.constant 0 : index
    %c0_21 = arith.constant 0 : index
    %48 = vector.load %arg4[%c1, %c0_20, %c0_21] : memref<2x32x16xbf16, #tpu.memory_space<vmem>>, vector<1x32x16xbf16>
    %49 = vector.shape_cast %48 : vector<1x32x16xbf16> to vector<32x16xbf16>
    %cst_22 = arith.constant dense<0.000000e+00> : vector<32x16xf32>
    %50 = tpu.matmul %47, %49, %cst_22 {dimension_numbers = #tpu.dot_dimension_numbers<[1], [0], [0], [1], [0, 0, 1, 1], [], []>} : vector<32x32xbf16>, vector<32x16xbf16>, vector<32x16xf32> -> vector<32x16xf32>
    %51 = vector.shape_cast %44 : vector<256x16xf32> to vector<32x8x16xf32>
    %52 = vector.shape_cast %50 : vector<32x16xf32> to vector<32x1x16xf32>
    %53 = vector.broadcast %52 : vector<32x1x16xf32> to vector<32x8x16xf32>
    %54 = arith.addf %51, %53 : vector<32x8x16xf32>
    %55 = vector.extract_strided_slice %2 {offsets = [1, 0], sizes = [1, 16], strides = [1, 1]} : vector<5x32xf32> to vector<1x16xf32>
    %56 = vector.shape_cast %55 : vector<1x16xf32> to vector<1x1x16xf32>
    %57 = vector.broadcast %56 : vector<1x1x16xf32> to vector<32x8x16xf32>
    %58 = arith.addf %54, %57 : vector<32x8x16xf32>
    %cst_23 = arith.constant 5.000000e-01 : f32
    %59 = vector.broadcast %cst_23 : f32 to vector<32x8x16xf32>
    %60 = arith.mulf %59, %58 : vector<32x8x16xf32>
    %cst_24 = arith.constant 0.707106769 : f32
    %61 = vector.broadcast %cst_24 : f32 to vector<32x8x16xf32>
    %62 = arith.mulf %58, %61 : vector<32x8x16xf32>
    %63 = math.erf %62 : vector<32x8x16xf32>
    %cst_25 = arith.constant 1.000000e+00 : f32
    %64 = vector.broadcast %cst_25 : f32 to vector<32x8x16xf32>
    %65 = arith.addf %64, %63 : vector<32x8x16xf32>
    %66 = arith.mulf %60, %65 : vector<32x8x16xf32>
    %67 = vector.shape_cast %66 : vector<32x8x16xf32> to vector<256x16xf32>
    %68 = arith.truncf %67 : vector<256x16xf32> to vector<256x16xbf16>
    %c0_26 = arith.constant 0 : index
    %c0_27 = arith.constant 0 : index
    %69 = vector.load %arg5[%c0_26, %c0_27] : memref<16x8xbf16, #tpu.memory_space<vmem>>, vector<16x8xbf16>
    %cst_28 = arith.constant dense<0.000000e+00> : vector<256x8xf32>
    %70 = tpu.matmul %68, %69, %cst_28 {dimension_numbers = #tpu.dot_dimension_numbers<[1], [0], [0], [1], [0, 0, 1, 1], [], []>} : vector<256x16xbf16>, vector<16x8xbf16>, vector<256x8xf32> -> vector<256x8xf32>
    %71 = vector.extract_strided_slice %2 {offsets = [2, 0], sizes = [1, 8], strides = [1, 1]} : vector<5x32xf32> to vector<1x8xf32>
    %72 = vector.broadcast %71 : vector<1x8xf32> to vector<256x8xf32>
    %73 = arith.addf %70, %72 : vector<256x8xf32>
    %cst_29 = arith.constant 5.000000e-01 : f32
    %74 = vector.broadcast %cst_29 : f32 to vector<256x8xf32>
    %75 = arith.mulf %74, %73 : vector<256x8xf32>
    %cst_30 = arith.constant 0.707106769 : f32
    %76 = vector.broadcast %cst_30 : f32 to vector<256x8xf32>
    %77 = arith.mulf %73, %76 : vector<256x8xf32>
    %78 = math.erf %77 : vector<256x8xf32>
    %cst_31 = arith.constant 1.000000e+00 : f32
    %79 = vector.broadcast %cst_31 : f32 to vector<256x8xf32>
    %80 = arith.addf %79, %78 : vector<256x8xf32>
    %81 = arith.mulf %75, %80 : vector<256x8xf32>
    %82 = vector.extract_strided_slice %2 {offsets = [3, 0], sizes = [1, 8], strides = [1, 1]} : vector<5x32xf32> to vector<1x8xf32>
    %83 = arith.truncf %82 : vector<1x8xf32> to vector<1x8xbf16>
    %84 = arith.truncf %81 : vector<256x8xf32> to vector<256x8xbf16>
    %85 = tpu.transpose %84, [1, 0] : vector<256x8xbf16> -> vector<8x256xbf16>
    %cst_32 = arith.constant dense<0.000000e+00> : vector<1x256xf32>
    %86 = tpu.matmul %83, %85, %cst_32 {dimension_numbers = #tpu.dot_dimension_numbers<[1], [0], [0], [1], [0, 0, 1, 1], [], []>} : vector<1x8xbf16>, vector<8x256xbf16>, vector<1x256xf32> -> vector<1x256xf32>
    %87 = vector.extract_strided_slice %2 {offsets = [4, 0], sizes = [1, 1], strides = [1, 1]} : vector<5x32xf32> to vector<1x1xf32>
    %88 = vector.broadcast %87 : vector<1x1xf32> to vector<1x256xf32>
    %89 = arith.addf %86, %88 : vector<1x256xf32>
    %90 = vector.shape_cast %89 : vector<1x256xf32> to vector<1x256xf32>
    %91 = vector.broadcast %90 : vector<1x256xf32> to vector<8x256xf32>
    %c0_33 = arith.constant 0 : index
    %c0_34 = arith.constant 0 : index
    %92 = vector.load %arg7[%c0_33, %c0_34] : memref<8x256xf32, #tpu.memory_space<vmem>>, vector<8x256xf32>
    tpu.vector_store %arg7[%c0_33, %c0_34], %91 {strides = array<i32>} : memref<8x256xf32, #tpu.memory_space<vmem>>, vector<8x256xf32>,
    return
  }
  func.func @transform_0(%arg0: i32) -> (i32, i32) {
    %c0_i32 = arith.constant 0 : i32
    %c0_i32_0 = arith.constant 0 : i32
    return %arg0, %c0_i32 : i32, i32
  }
  func.func @transform_1(%arg0: i32) -> (i32, i32) {
    %c0_i32 = arith.constant 0 : i32
    %c0_i32_0 = arith.constant 0 : i32
    %c0_i32_1 = arith.constant 0 : i32
    return %c0_i32, %c0_i32_0 : i32, i32
  }
  func.func @transform_2(%arg0: i32) -> (i32, i32) {
    %c0_i32 = arith.constant 0 : i32
    %c0_i32_0 = arith.constant 0 : i32
    %c0_i32_1 = arith.constant 0 : i32
    return %c0_i32, %c0_i32_0 : i32, i32
  }
  func.func @transform_3(%arg0: i32) -> (i32, i32, i32) {
    %c0_i32 = arith.constant 0 : i32
    %c0_i32_0 = arith.constant 0 : i32
    %c0_i32_1 = arith.constant 0 : i32
    %c0_i32_2 = arith.constant 0 : i32
    return %c0_i32, %c0_i32_0, %c0_i32_1 : i32, i32, i32
  }
  func.func @transform_4(%arg0: i32) -> (i32, i32) {
    %c0_i32 = arith.constant 0 : i32
    %c0_i32_0 = arith.constant 0 : i32
    %c0_i32_1 = arith.constant 0 : i32
    return %c0_i32, %c0_i32_0 : i32, i32
  }
  func.func @transform_5(%arg0: i32) -> (i32, i32) {
    %c0_i32 = arith.constant 0 : i32
    %c0_i32_0 = arith.constant 0 : i32
    %c0_i32_1 = arith.constant 0 : i32
    return %c0_i32, %c0_i32_0 : i32, i32
  }
  func.func @transform_6(%arg0: i32) -> (i32, i32) {
    %c0_i32 = arith.constant 0 : i32
    %c0_i32_0 = arith.constant 0 : i32
    return %arg0, %c0_i32 : i32, i32
  }
}

</mosaic_0001>

<llo_original>
// kernel: squeeze.1
$region0: #{squeeze.1}
  %s0 = inlined_call_operand.vmem [shape: f32[256], index: 0, kind: input, shape index: {}]
  %s1 = inlined_call_operand.vmem [shape: f32[32,8,1], index: 1, kind: output, shape index: {}]
  $region1: #{squeeze.1} parent=0
    #allocation0 [shape = 'u8[4096]{0}', space=vmem, size = 0x1000, scoped, tag = 'scoped mem for input reshape']
    %s3 = sshllo.u32 0, 2
    %v4 = vld [vmem:[%s0] sm:%s3]
    %5 = vst [vmem:[#allocation0] sm:%s3] %v4
    %v6 = vld [vmem:[#allocation0] sm:$0x3]
    %vm7 = vcmask 64512
    %8 = vst.msk [vmem:[%s1] ss:$16 sm:$0x3] %vm7, %v6
    %v9 = vld [vmem:[#allocation0] sm:$0x3]
    %10 = vrot.lane.b32.xlu0 %v9, 120
    %v11 = vpop.permute.xlu0 %10
    %vm12 = vcmask 64512
    %s13 = scalar_lea.vmem %s1, 1
    %14 = vst.msk [vmem:[%s13] ss:$16 sm:$0x3] %vm12, %v11
    %v15 = vld [vmem:[#allocation0] sm:$0x3]
    %16 = vrot.lane.b32.xlu0 %v15, 112
    %v17 = vpop.permute.xlu0 %16
    %vm18 = vcmask 64512
    %s19 = scalar_lea.vmem %s1, 2
    %20 = vst.msk [vmem:[%s19] ss:$16 sm:$0x3] %vm18, %v17
    %v21 = vld [vmem:[#allocation0] sm:$0x3]
    %22 = vrot.lane.b32.xlu0 %v21, 104
    %v23 = vpop.permute.xlu0 %22
    %vm24 = vcmask 64512
    %s25 = scalar_lea.vmem %s1, 3
    %26 = vst.msk [vmem:[%s25] ss:$16 sm:$0x3] %vm24, %v23
    %v27 = vld [vmem:[#allocation0] sm:$0x3]
    %28 = vrot.lane.b32.xlu0 %v27, 96
    %v29 = vpop.permute.xlu0 %28
    %vm30 = vcmask 64512
    %s31 = scalar_lea.vmem %s1, 4
    %32 = vst.msk [vmem:[%s31] ss:$16 sm:$0x3] %vm30, %v29
    %v33 = vld [vmem:[#allocation0] sm:$0x3]
    %34 = vrot.lane.b32.xlu0 %v33, 88
    %v35 = vpop.permute.xlu0 %34
    %vm36 = vcmask 64512
    %s37 = scalar_lea.vmem %s1, 5
    %38 = vst.msk [vmem:[%s37] ss:$16 sm:$0x3] %vm36, %v35
    %v39 = vld [vmem:[#allocation0] sm:$0x3]
    %40 = vrot.lane.b32.xlu0 %v39, 80
    %v41 = vpop.permute.xlu0 %40
    %vm42 = vcmask 64512
    %s43 = scalar_lea.vmem %s1, 6
    %44 = vst.msk [vmem:[%s43] ss:$16 sm:$0x3] %vm42, %v41
    %v45 = vld [vmem:[#allocation0] sm:$0x3]
    %46 = vrot.lane.b32.xlu0 %v45, 72
    %v47 = vpop.permute.xlu0 %46
    %vm48 = vcmask 64512
    %s49 = scalar_lea.vmem %s1, 7
    %50 = vst.msk [vmem:[%s49] ss:$16 sm:$0x3] %vm48, %v47
    %v51 = vld [vmem:[#allocation0] sm:$0x3]
    %52 = vrot.lane.b32.xlu0 %v51, 64
    %v53 = vpop.permute.xlu0 %52
    %vm54 = vcmask 64512
    %s55 = scalar_lea.vmem %s1, 8
    %56 = vst.msk [vmem:[%s55] ss:$16 sm:$0x3] %vm54, %v53
    %v57 = vld [vmem:[#allocation0] sm:$0x3]
    %58 = vrot.lane.b32.xlu0 %v57, 56
    %v59 = vpop.permute.xlu0 %58
    %vm60 = vcmask 64512
    %s61 = scalar_lea.vmem %s1, 9
    %62 = vst.msk [vmem:[%s61] ss:$16 sm:$0x3] %vm60, %v59
    %v63 = vld [vmem:[#allocation0] sm:$0x3]
    %64 = vrot.lane.b32.xlu0 %v63, 48
    %v65 = vpop.permute.xlu0 %64
    %vm66 = vcmask 64512
    %s67 = scalar_lea.vmem %s1, 10
    %68 = vst.msk [vmem:[%s67] ss:$16 sm:$0x3] %vm66, %v65
    %v69 = vld [vmem:[#allocation0] sm:$0x3]
    %70 = vrot.lane.b32.xlu0 %v69, 40
    %v71 = vpop.permute.xlu0 %70
    %vm72 = vcmask 64512
    %s73 = scalar_lea.vmem %s1, 11
    %74 = vst.msk [vmem:[%s73] ss:$16 sm:$0x3] %vm72, %v71
    %v75 = vld [vmem:[#allocation0] sm:$0x3]
    %76 = vrot.lane.b32.xlu0 %v75, 32
    %v77 = vpop.permute.xlu0 %76
    %vm78 = vcmask 64512
    %s79 = scalar_lea.vmem %s1, 12
    %80 = vst.msk [vmem:[%s79] ss:$16 sm:$0x3] %vm78, %v77
    %v81 = vld [vmem:[#allocation0] sm:$0x3]
    %82 = vrot.lane.b32.xlu0 %v81, 24
    %v83 = vpop.permute.xlu0 %82
    %vm84 = vcmask 64512
    %s85 = scalar_lea.vmem %s1, 13
    %86 = vst.msk [vmem:[%s85] ss:$16 sm:$0x3] %vm84, %v83
    %v87 = vld [vmem:[#allocation0] sm:$0x3]
    %88 = vrot.lane.b32.xlu0 %v87, 16
    %v89 = vpop.permute.xlu0 %88
    %vm90 = vcmask 64512
    %s91 = scalar_lea.vmem %s1, 14
    %92 = vst.msk [vmem:[%s91] ss:$16 sm:$0x3] %vm90, %v89
    %v93 = vld [vmem:[#allocation0] sm:$0x3]
    %94 = vrot.lane.b32.xlu0 %v93, 8
    %v95 = vpop.permute.xlu0 %94
    %vm96 = vcmask 64512
    %s97 = scalar_lea.vmem %s1, 15
    %98 = vst.msk [vmem:[%s97] ss:$16 sm:$0x3] %vm96, %v95

// kernel: mask_predictor.1
$region0: #{mask_predictor.1}
  #allocation0 [shape = 'u32[]', space=smem, size = 0x4, offset = 0x4, fixed_abs, tag = 'smem constant byte address 0x4 - core index']
  #allocation1 [shape = 'u32[144,128]{1,0:T(1,128)}', space=vmem, size = 0x12000, scoped, tag = 'internal scratch']
  %s0 = inlined_call_operand.hbm [shape: f32[256,32], index: 0, kind: input, shape index: {}]
  %s1 = inlined_call_operand.vmem [shape: f32[2,32], index: 1, kind: input, shape index: {}]
  %s2 = inlined_call_operand.vmem [shape: bf16[32,32], index: 2, kind: input, shape index: {}]
  %s3 = inlined_call_operand.vmem [shape: bf16[2,32,16], index: 3, kind: input, shape index: {}]
  %s4 = inlined_call_operand.vmem [shape: bf16[16,8], index: 4, kind: input, shape index: {}]
  %s5 = inlined_call_operand.vmem [shape: f32[5,32], index: 5, kind: input, shape index: {}]
  %s6 = inlined_call_operand.vmem [shape: f32[8,256], index: 6, kind: output, shape index: {}]
  %s7 = sld [smem:[#allocation0]]
  $region38: #{mask_predictor.1} parent=0
    _
  %s9 = ssub.s32 1, %s7
  %s10 = scalar_select 0, %s9, %s7
  $region1: #{mask_predictor.1} parent=0
    #allocation2 [shape = 'u8[131072]{0}', space=vmem, size = 0x20000, scoped, tag = 'input window, operand 0, single buffered']
    #allocation3 [shape = 's32[1]{0}', space=sflag, size = 0x4, scoped, tag = 'scoped memory for mask_predictor.1']
    %11 = vsyncpa [#allocation3], 0
    // Predicated region
    $region2: #{mask_predictor.1} parent=1 // pred_check
      _
    $region3: #{mask_predictor.1} parent=1 // pred_check_branch
      %13 = sbr.rel (0) target = $region5
    $region4: #{mask_predictor.1} parent=1 // pred_region
      %s15 = ssub.s32 4096, 4096
      %16 = vsyncadd [#allocation3], %s15
      %s17 = sshll.u32 [#allocation2], 4
      %s18 = int_to_ptr.vmem [resolvable:$true] %s17
      %23 = dma.hbm_to_vmem [thread:$0]  %s0, 4096, %s18, [#allocation3], 128, 128, 8
    $region5: #{mask_predictor.1} parent=1 // pred_fallthru
      _
    // Predicated region
    $region6: #{mask_predictor.1} parent=1 // pred_check
      _
    $region7: #{mask_predictor.1} parent=1 // pred_check_branch
      %25 = sbr.rel (0) target = $region9
    $region8: #{mask_predictor.1} parent=1 // pred_region
      _
    $region9: #{mask_predictor.1} parent=1 // pred_fallthru
      _
    // Predicated region
    $region10: #{mask_predictor.1} parent=1 // pred_check
      _
    $region11: #{mask_predictor.1} parent=1 // pred_check_branch
      %27 = sbr.rel (0) target = $region13
    $region12: #{mask_predictor.1} parent=1 // pred_region
      _
    $region13: #{mask_predictor.1} parent=1 // pred_fallthru
      _
    // Predicated region
    $region14: #{mask_predictor.1} parent=1 // pred_check
      _
    $region15: #{mask_predictor.1} parent=1 // pred_check_branch
      %29 = sbr.rel (0) target = $region17
    $region16: #{mask_predictor.1} parent=1 // pred_region
      _
    $region17: #{mask_predictor.1} parent=1 // pred_fallthru
      _
    // Predicated region
    $region18: #{mask_predictor.1} parent=1 // pred_check
      _
    $region19: #{mask_predictor.1} parent=1 // pred_check_branch
      %31 = sbr.rel (0) target = $region21
    $region20: #{mask_predictor.1} parent=1 // pred_region
      _
    $region21: #{mask_predictor.1} parent=1 // pred_fallthru
      _
    // Predicated region
    $region22: #{mask_predictor.1} parent=1 // pred_check
      _
    $region23: #{mask_predictor.1} parent=1 // pred_check_branch
      %33 = sbr.rel (0) target = $region25
    $region24: #{mask_predictor.1} parent=1 // pred_region
      _
    $region25: #{mask_predictor.1} parent=1 // pred_fallthru
      _
    // Predicated region
    $region26: #{mask_predictor.1} parent=1 // pred_check
      _
    $region27: #{mask_predictor.1} parent=1 // pred_check_branch
      %35 = sbr.rel (0) target = $region29
    $region28: #{mask_predictor.1} parent=1 // pred_region
      %36 = dma.done [#allocation3], 4096
    $region29: #{mask_predictor.1} parent=1 // pred_fallthru
      _
    %v38 = vld [vmem:[#allocation2] sm:$0xff]
    %v39 = vld [vmem:[#allocation2 + $0x8] sm:$0xff]
    %v40 = vld [vmem:[#allocation2 + $0x10] sm:$0xff]
    %v41 = vld [vmem:[#allocation2 + $0x18] sm:$0xff]
    %v42 = vld [vmem:[#allocation2 + $0x20] sm:$0xff]
    %v43 = vld [vmem:[#allocation2 + $0x28] sm:$0xff]
    %v44 = vld [vmem:[#allocation2 + $0x30] sm:$0xff]
    %v45 = vld [vmem:[#allocation2 + $0x38] sm:$0xff]
    %v46 = vld [vmem:[#allocation2 + $0x40] sm:$0xff]
    %v47 = vld [vmem:[#allocation2 + $0x48] sm:$0xff]
    %v48 = vld [vmem:[#allocation2 + $0x50] sm:$0xff]
    %v49 = vld [vmem:[#allocation2 + $0x58] sm:$0xff]
    %v50 = vld [vmem:[#allocation2 + $0x60] sm:$0xff]
    %v51 = vld [vmem:[#allocation2 + $0x68] sm:$0xff]
    %v52 = vld [vmem:[#allocation2 + $0x70] sm:$0xff]
    %v53 = vld [vmem:[#allocation2 + $0x78] sm:$0xff]
    %v54 = vld [vmem:[#allocation2 + $0x80] sm:$0xff]
    %v55 = vld [vmem:[#allocation2 + $0x88] sm:$0xff]
    %v56 = vld [vmem:[#allocation2 + $0x90] sm:$0xff]
    %v57 = vld [vmem:[#allocation2 + $0x98] sm:$0xff]
    %v58 = vld [vmem:[#allocation2 + $0xa0] sm:$0xff]
    %v59 = vld [vmem:[#allocation2 + $0xa8] sm:$0xff]
    %v60 = vld [vmem:[#allocation2 + $0xb0] sm:$0xff]
    %v61 = vld [vmem:[#allocation2 + $0xb8] sm:$0xff]
    %v62 = vld [vmem:[#allocation2 + $0xc0] sm:$0xff]
    %v63 = vld [vmem:[#allocation2 + $0xc8] sm:$0xff]
    %v64 = vld [vmem:[#allocation2 + $0xd0] sm:$0xff]
    %v65 = vld [vmem:[#allocation2 + $0xd8] sm:$0xff]
    %v66 = vld [vmem:[#allocation2 + $0xe0] sm:$0xff]
    %v67 = vld [vmem:[#allocation2 + $0xe8] sm:$0xff]
    %v68 = vld [vmem:[#allocation2 + $0xf0] sm:$0xff]
    %v69 = vld [vmem:[#allocation2 + $0xf8] sm:$0xff]
    %v70 = vld [vmem:[%s1] sm:$0x3]
    %v71 = vld [vmem:[%s5] sm:$0x1f]
    %vm72 = vcmask 261120
    %v73 = vsel %vm72, %v38, 0.0
    %74 = vadd.xlane.f32.xlu0 %v73
    %v75 = vpop.xlane.xlu0 %74
    %v76 = vsel %vm72, %v39, 0.0
    %77 = vadd.xlane.f32.xlu0 %v76
    %v78 = vpop.xlane.xlu0 %77
    %v79 = vsel %vm72, %v40, 0.0
    %80 = vadd.xlane.f32.xlu0 %v79
    %v81 = vpop.xlane.xlu0 %80
    %v82 = vsel %vm72, %v41, 0.0
    %83 = vadd.xlane.f32.xlu0 %v82
    %v84 = vpop.xlane.xlu0 %83
    %v85 = vsel %vm72, %v42, 0.0
    %86 = vadd.xlane.f32.xlu0 %v85
    %v87 = vpop.xlane.xlu0 %86
    %v88 = vsel %vm72, %v43, 0.0
    %89 = vadd.xlane.f32.xlu0 %v88
    %v90 = vpop.xlane.xlu0 %89
    %v91 = vsel %vm72, %v44, 0.0
    %92 = vadd.xlane.f32.xlu0 %v91
    %v93 = vpop.xlane.xlu0 %92
    %v94 = vsel %vm72, %v45, 0.0
    %95 = vadd.xlane.f32.xlu0 %v94
    %v96 = vpop.xlane.xlu0 %95
    %v97 = vsel %vm72, %v46, 0.0
    %98 = vadd.xlane.f32.xlu0 %v97
    %v99 = vpop.xlane.xlu0 %98
    %v100 = vsel %vm72, %v47, 0.0
    %101 = vadd.xlane.f32.xlu0 %v100
    %v102 = vpop.xlane.xlu0 %101
    %v103 = vsel %vm72, %v48, 0.0
    %104 = vadd.xlane.f32.xlu0 %v103
    %v105 = vpop.xlane.xlu0 %104
    %v106 = vsel %vm72, %v49, 0.0
    %107 = vadd.xlane.f32.xlu0 %v106
    %v108 = vpop.xlane.xlu0 %107
    %v109 = vsel %vm72, %v50, 0.0
    %110 = vadd.xlane.f32.xlu0 %v109
    %v111 = vpop.xlane.xlu0 %110
    %v112 = vsel %vm72, %v51, 0.0
    %113 = vadd.xlane.f32.xlu0 %v112
    %v114 = vpop.xlane.xlu0 %113
    %v115 = vsel %vm72, %v52, 0.0
    %116 = vadd.xlane.f32.xlu0 %v115
    %v117 = vpop.xlane.xlu0 %116
    %v118 = vsel %vm72, %v53, 0.0
    %119 = vadd.xlane.f32.xlu0 %v118
    %v120 = vpop.xlane.xlu0 %119
    %v121 = vsel %vm72, %v54, 0.0
    %122 = vadd.xlane.f32.xlu0 %v121
    %v123 = vpop.xlane.xlu0 %122
    %v124 = vsel %vm72, %v55, 0.0
    %125 = vadd.xlane.f32.xlu0 %v124
    %v126 = vpop.xlane.xlu0 %125
    %v127 = vsel %vm72, %v56, 0.0
    %128 = vadd.xlane.f32.xlu0 %v127
    %v129 = vpop.xlane.xlu0 %128
    %v130 = vsel %vm72, %v57, 0.0
    %131 = vadd.xlane.f32.xlu0 %v130
    %v132 = vpop.xlane.xlu0 %131
    %v133 = vsel %vm72, %v58, 0.0
    %134 = vadd.xlane.f32.xlu0 %v133
    %v135 = vpop.xlane.xlu0 %134
    %v136 = vsel %vm72, %v59, 0.0
    %137 = vadd.xlane.f32.xlu0 %v136
    %v138 = vpop.xlane.xlu0 %137
    %v139 = vsel %vm72, %v60, 0.0
    %140 = vadd.xlane.f32.xlu0 %v139
    %v141 = vpop.xlane.xlu0 %140
    %v142 = vsel %vm72, %v61, 0.0
    %143 = vadd.xlane.f32.xlu0 %v142
    %v144 = vpop.xlane.xlu0 %143
    %v145 = vsel %vm72, %v62, 0.0
    %146 = vadd.xlane.f32.xlu0 %v145
    %v147 = vpop.xlane.xlu0 %146
    %v148 = vsel %vm72, %v63, 0.0
    %149 = vadd.xlane.f32.xlu0 %v148
    %v150 = vpop.xlane.xlu0 %149
    %v151 = vsel %vm72, %v64, 0.0
    %152 = vadd.xlane.f32.xlu0 %v151
    %v153 = vpop.xlane.xlu0 %152
    %v154 = vsel %vm72, %v65, 0.0
    %155 = vadd.xlane.f32.xlu0 %v154
    %v156 = vpop.xlane.xlu0 %155
    %v157 = vsel %vm72, %v66, 0.0
    %158 = vadd.xlane.f32.xlu0 %v157
    %v159 = vpop.xlane.xlu0 %158
    %v160 = vsel %vm72, %v67, 0.0
    %161 = vadd.xlane.f32.xlu0 %v160
    %v162 = vpop.xlane.xlu0 %161
    %v163 = vsel %vm72, %v68, 0.0
    %164 = vadd.xlane.f32.xlu0 %v163
    %v165 = vpop.xlane.xlu0 %164
    %v166 = vsel %vm72, %v69, 0.0
    %167 = vadd.xlane.f32.xlu0 %v166
    %v168 = vpop.xlane.xlu0 %167
    %v169 = vrcp.pop 32.0
    %v170 = vmul.f32 %v75, %v169
    %v171 = vmul.f32 %v78, %v169
    %v172 = vmul.f32 %v81, %v169
    %v173 = vmul.f32 %v84, %v169
    %v174 = vmul.f32 %v87, %v169
    %v175 = vmul.f32 %v90, %v169
    %v176 = vmul.f32 %v93, %v169
    %v177 = vmul.f32 %v96, %v169
    %v178 = vmul.f32 %v99, %v169
    %v179 = vmul.f32 %v102, %v169
    %v180 = vmul.f32 %v105, %v169
    %v181 = vmul.f32 %v108, %v169
    %v182 = vmul.f32 %v111, %v169
    %v183 = vmul.f32 %v114, %v169
    %v184 = vmul.f32 %v117, %v169
    %v185 = vmul.f32 %v120, %v169
    %v186 = vmul.f32 %v123, %v169
    %v187 = vmul.f32 %v126, %v169
    %v188 = vmul.f32 %v129, %v169
    %v189 = vmul.f32 %v132, %v169
    %v190 = vmul.f32 %v135, %v169
    %v191 = vmul.f32 %v138, %v169
    %v192 = vmul.f32 %v141, %v169
    %v193 = vmul.f32 %v144, %v169
    %v194 = vmul.f32 %v147, %v169
    %v195 = vmul.f32 %v150, %v169
    %v196 = vmul.f32 %v153, %v169
    %v197 = vmul.f32 %v156, %v169
    %v198 = vmul.f32 %v159, %v169
    %v199 = vmul.f32 %v162, %v169
    %v200 = vmul.f32 %v165, %v169
    %v201 = vmul.f32 %v168, %v169
    %v202 = vsub.f32 %v38, %v170
    %v203 = vsub.f32 %v39, %v171
    %v204 = vsub.f32 %v40, %v172
    %v205 = vsub.f32 %v41, %v173
    %v206 = vsub.f32 %v42, %v174
    %v207 = vsub.f32 %v43, %v175
    %v208 = vsub.f32 %v44, %v176
    %v209 = vsub.f32 %v45, %v177
    %v210 = vsub.f32 %v46, %v178
    %v211 = vsub.f32 %v47, %v179
    %v212 = vsub.f32 %v48, %v180
    %v213 = vsub.f32 %v49, %v181
    %v214 = vsub.f32 %v50, %v182
    %v215 = vsub.f32 %v51, %v183
    %v216 = vsub.f32 %v52, %v184
    %v217 = vsub.f32 %v53, %v185
    %v218 = vsub.f32 %v54, %v186
    %v219 = vsub.f32 %v55, %v187
    %v220 = vsub.f32 %v56, %v188
    %v221 = vsub.f32 %v57, %v189
    %v222 = vsub.f32 %v58, %v190
    %v223 = vsub.f32 %v59, %v191
    %v224 = vsub.f32 %v60, %v192
    %v225 = vsub.f32 %v61, %v193
    %v226 = vsub.f32 %v62, %v194
    %v227 = vsub.f32 %v63, %v195
    %v228 = vsub.f32 %v64, %v196
    %v229 = vsub.f32 %v65, %v197
    %v230 = vsub.f32 %v66, %v198
    %v231 = vsub.f32 %v67, %v199
    %v232 = vsub.f32 %v68, %v200
    %v233 = vsub.f32 %v69, %v201
    %v234 = vmul.f32 %v202, %v202
    %v235 = vmul.f32 %v203, %v203
    %v236 = vmul.f32 %v204, %v204
    %v237 = vmul.f32 %v205, %v205
    %v238 = vmul.f32 %v206, %v206
    %v239 = vmul.f32 %v207, %v207
    %v240 = vmul.f32 %v208, %v208
    %v241 = vmul.f32 %v209, %v209
    %v242 = vmul.f32 %v210, %v210
    %v243 = vmul.f32 %v211, %v211
    %v244 = vmul.f32 %v212, %v212
    %v245 = vmul.f32 %v213, %v213
    %v246 = vmul.f32 %v214, %v214
    %v247 = vmul.f32 %v215, %v215
    %v248 = vmul.f32 %v216, %v216
    %v249 = vmul.f32 %v217, %v217
    %v250 = vmul.f32 %v218, %v218
    %v251 = vmul.f32 %v219, %v219
    %v252 = vmul.f32 %v220, %v220
    %v253 = vmul.f32 %v221, %v221
    %v254 = vmul.f32 %v222, %v222
    %v255 = vmul.f32 %v223, %v223
    %v256 = vmul.f32 %v224, %v224
    %v257 = vmul.f32 %v225, %v225
    %v258 = vmul.f32 %v226, %v226
    %v259 = vmul.f32 %v227, %v227
    %v260 = vmul.f32 %v228, %v228
    %v261 = vmul.f32 %v229, %v229
    %v262 = vmul.f32 %v230, %v230
    %v263 = vmul.f32 %v231, %v231
    %v264 = vmul.f32 %v232, %v232
    %v265 = vmul.f32 %v233, %v233
    %v266 = vsel %vm72, %v234, 0.0
    %267 = vadd.xlane.f32.xlu0 %v266
    %v268 = vpop.xlane.xlu0 %267
    %v269 = vsel %vm72, %v235, 0.0
    %270 = vadd.xlane.f32.xlu0 %v269
    %v271 = vpop.xlane.xlu0 %270
    %v272 = vsel %vm72, %v236, 0.0
    %273 = vadd.xlane.f32.xlu0 %v272
    %v274 = vpop.xlane.xlu0 %273
    %v275 = vsel %vm72, %v237, 0.0
    %276 = vadd.xlane.f32.xlu0 %v275
    %v277 = vpop.xlane.xlu0 %276
    %v278 = vsel %vm72, %v238, 0.0
    %279 = vadd.xlane.f32.xlu0 %v278
    %v280 = vpop.xlane.xlu0 %279
    %v281 = vsel %vm72, %v239, 0.0
    %282 = vadd.xlane.f32.xlu0 %v281
    %v283 = vpop.xlane.xlu0 %282
    %v284 = vsel %vm72, %v240, 0.0
    %285 = vadd.xlane.f32.xlu0 %v284
    %v286 = vpop.xlane.xlu0 %285
    %v287 = vsel %vm72, %v241, 0.0
    %288 = vadd.xlane.f32.xlu0 %v287
    %v289 = vpop.xlane.xlu0 %288
    %v290 = vsel %vm72, %v242, 0.0
    %291 = vadd.xlane.f32.xlu0 %v290
    %v292 = vpop.xlane.xlu0 %291
    %v293 = vsel %vm72, %v243, 0.0
    %294 = vadd.xlane.f32.xlu0 %v293
    %v295 = vpop.xlane.xlu0 %294
    %v296 = vsel %vm72, %v244, 0.0
    %297 = vadd.xlane.f32.xlu0 %v296
    %v298 = vpop.xlane.xlu0 %297
    %v299 = vsel %vm72, %v245, 0.0
    %300 = vadd.xlane.f32.xlu0 %v299
    %v301 = vpop.xlane.xlu0 %300
    %v302 = vsel %vm72, %v246, 0.0
    %303 = vadd.xlane.f32.xlu0 %v302
    %v304 = vpop.xlane.xlu0 %303
    %v305 = vsel %vm72, %v247, 0.0
    %306 = vadd.xlane.f32.xlu0 %v305
    %v307 = vpop.xlane.xlu0 %306
    %v308 = vsel %vm72, %v248, 0.0
    %309 = vadd.xlane.f32.xlu0 %v308
    %v310 = vpop.xlane.xlu0 %309
    %v311 = vsel %vm72, %v249, 0.0
    %312 = vadd.xlane.f32.xlu0 %v311
    %v313 = vpop.xlane.xlu0 %312
    %v314 = vsel %vm72, %v250, 0.0
    %315 = vadd.xlane.f32.xlu0 %v314
    %v316 = vpop.xlane.xlu0 %315
    %v317 = vsel %vm72, %v251, 0.0
    %318 = vadd.xlane.f32.xlu0 %v317
    %v319 = vpop.xlane.xlu0 %318
    %v320 = vsel %vm72, %v252, 0.0
    %321 = vadd.xlane.f32.xlu0 %v320
    %v322 = vpop.xlane.xlu0 %321
    %v323 = vsel %vm72, %v253, 0.0
    %324 = vadd.xlane.f32.xlu0 %v323
    %v325 = vpop.xlane.xlu0 %324
    %v326 = vsel %vm72, %v254, 0.0
    %327 = vadd.xlane.f32.xlu0 %v326
    %v328 = vpop.xlane.xlu0 %327
    %v329 = vsel %vm72, %v255, 0.0
    %330 = vadd.xlane.f32.xlu0 %v329
    %v331 = vpop.xlane.xlu0 %330
    %v332 = vsel %vm72, %v256, 0.0
    %333 = vadd.xlane.f32.xlu0 %v332
    %v334 = vpop.xlane.xlu0 %333
    %v335 = vsel %vm72, %v257, 0.0
    %336 = vadd.xlane.f32.xlu0 %v335
    %v337 = vpop.xlane.xlu0 %336
    %v338 = vsel %vm72, %v258, 0.0
    %339 = vadd.xlane.f32.xlu0 %v338
    %v340 = vpop.xlane.xlu0 %339
    %v341 = vsel %vm72, %v259, 0.0
    %342 = vadd.xlane.f32.xlu0 %v341
    %v343 = vpop.xlane.xlu0 %342
    %v344 = vsel %vm72, %v260, 0.0
    %345 = vadd.xlane.f32.xlu0 %v344
    %v346 = vpop.xlane.xlu0 %345
    %v347 = vsel %vm72, %v261, 0.0
    %348 = vadd.xlane.f32.xlu0 %v347
    %v349 = vpop.xlane.xlu0 %348
    %v350 = vsel %vm72, %v262, 0.0
    %351 = vadd.xlane.f32.xlu0 %v350
    %v352 = vpop.xlane.xlu0 %351
    %v353 = vsel %vm72, %v263, 0.0
    %354 = vadd.xlane.f32.xlu0 %v353
    %v355 = vpop.xlane.xlu0 %354
    %v356 = vsel %vm72, %v264, 0.0
    %357 = vadd.xlane.f32.xlu0 %v356
    %v358 = vpop.xlane.xlu0 %357
    %v359 = vsel %vm72, %v265, 0.0
    %360 = vadd.xlane.f32.xlu0 %v359
    %v361 = vpop.xlane.xlu0 %360
    %v362 = vmul.f32 %v268, %v169
    %v363 = vmul.f32 %v271, %v169
    %v364 = vmul.f32 %v274, %v169
    %v365 = vmul.f32 %v277, %v169
    %v366 = vmul.f32 %v280, %v169
    %v367 = vmul.f32 %v283, %v169
    %v368 = vmul.f32 %v286, %v169
    %v369 = vmul.f32 %v289, %v169
    %v370 = vmul.f32 %v292, %v169
    %v371 = vmul.f32 %v295, %v169
    %v372 = vmul.f32 %v298, %v169
    %v373 = vmul.f32 %v301, %v169
    %v374 = vmul.f32 %v304, %v169
    %v375 = vmul.f32 %v307, %v169
    %v376 = vmul.f32 %v310, %v169
    %v377 = vmul.f32 %v313, %v169
    %v378 = vmul.f32 %v316, %v169
    %v379 = vmul.f32 %v319, %v169
    %v380 = vmul.f32 %v322, %v169
    %v381 = vmul.f32 %v325, %v169
    %v382 = vmul.f32 %v328, %v169
    %v383 = vmul.f32 %v331, %v169
    %v384 = vmul.f32 %v334, %v169
    %v385 = vmul.f32 %v337, %v169
    %v386 = vmul.f32 %v340, %v169
    %v387 = vmul.f32 %v343, %v169
    %v388 = vmul.f32 %v346, %v169
    %v389 = vmul.f32 %v349, %v169
    %v390 = vmul.f32 %v352, %v169
    %v391 = vmul.f32 %v355, %v169
    %v392 = vmul.f32 %v358, %v169
    %v393 = vmul.f32 %v361, %v169
    %v394 = vadd.f32 %v362, 1e-05
    %v395 = vadd.f32 %v363, 1e-05
    %v396 = vadd.f32 %v364, 1e-05
    %v397 = vadd.f32 %v365, 1e-05
    %v398 = vadd.f32 %v366, 1e-05
    %v399 = vadd.f32 %v367, 1e-05
    %v400 = vadd.f32 %v368, 1e-05
    %v401 = vadd.f32 %v369, 1e-05
    %v402 = vadd.f32 %v370, 1e-05
    %v403 = vadd.f32 %v371, 1e-05
    %v404 = vadd.f32 %v372, 1e-05
    %v405 = vadd.f32 %v373, 1e-05
    %v406 = vadd.f32 %v374, 1e-05
    %v407 = vadd.f32 %v375, 1e-05
    %v408 = vadd.f32 %v376, 1e-05
    %v409 = vadd.f32 %v377, 1e-05
    %v410 = vadd.f32 %v378, 1e-05
    %v411 = vadd.f32 %v379, 1e-05
    %v412 = vadd.f32 %v380, 1e-05
    %v413 = vadd.f32 %v381, 1e-05
    %v414 = vadd.f32 %v382, 1e-05
    %v415 = vadd.f32 %v383, 1e-05
    %v416 = vadd.f32 %v384, 1e-05
    %v417 = vadd.f32 %v385, 1e-05
    %v418 = vadd.f32 %v386, 1e-05
    %v419 = vadd.f32 %v387, 1e-05
    %v420 = vadd.f32 %v388, 1e-05
    %v421 = vadd.f32 %v389, 1e-05
    %v422 = vadd.f32 %v390, 1e-05
    %v423 = vadd.f32 %v391, 1e-05
    %v424 = vadd.f32 %v392, 1e-05
    %v425 = vadd.f32 %v393, 1e-05
    %v426 = vrsqrt.pop %v394
    %v427 = vrsqrt.pop %v395
    %v428 = vrsqrt.pop %v396
    %v429 = vrsqrt.pop %v397
    %v430 = vrsqrt.pop %v398
    %v431 = vrsqrt.pop %v399
    %v432 = vrsqrt.pop %v400
    %v433 = vrsqrt.pop %v401
    %v434 = vrsqrt.pop %v402
    %v435 = vrsqrt.pop %v403
    %v436 = vrsqrt.pop %v404
    %v437 = vrsqrt.pop %v405
    %v438 = vrsqrt.pop %v406
    %v439 = vrsqrt.pop %v407
    %v440 = vrsqrt.pop %v408
    %v441 = vrsqrt.pop %v409
    %v442 = vrsqrt.pop %v410
    %v443 = vrsqrt.pop %v411
    %v444 = vrsqrt.pop %v412
    %v445 = vrsqrt.pop %v413
    %v446 = vrsqrt.pop %v414
    %v447 = vrsqrt.pop %v415
    %v448 = vrsqrt.pop %v416
    %v449 = vrsqrt.pop %v417
    %v450 = vrsqrt.pop %v418
    %v451 = vrsqrt.pop %v419
    %v452 = vrsqrt.pop %v420
    %v453 = vrsqrt.pop %v421
    %v454 = vrsqrt.pop %v422
    %v455 = vrsqrt.pop %v423
    %v456 = vrsqrt.pop %v424
    %v457 = vrsqrt.pop %v425
    %v458 = vmul.f32 %v202, %v426
    %v459 = vmul.f32 %v203, %v427
    %v460 = vmul.f32 %v204, %v428
    %v461 = vmul.f32 %v205, %v429
    %v462 = vmul.f32 %v206, %v430
    %v463 = vmul.f32 %v207, %v431
    %v464 = vmul.f32 %v208, %v432
    %v465 = vmul.f32 %v209, %v433
    %v466 = vmul.f32 %v210, %v434
    %v467 = vmul.f32 %v211, %v435
    %v468 = vmul.f32 %v212, %v436
    %v469 = vmul.f32 %v213, %v437
    %v470 = vmul.f32 %v214, %v438
    %v471 = vmul.f32 %v215, %v439
    %v472 = vmul.f32 %v216, %v440
    %v473 = vmul.f32 %v217, %v441
    %v474 = vmul.f32 %v218, %v442
    %v475 = vmul.f32 %v219, %v443
    %v476 = vmul.f32 %v220, %v444
    %v477 = vmul.f32 %v221, %v445
    %v478 = vmul.f32 %v222, %v446
    %v479 = vmul.f32 %v223, %v447
    %v480 = vmul.f32 %v224, %v448
    %v481 = vmul.f32 %v225, %v449
    %v482 = vmul.f32 %v226, %v450
    %v483 = vmul.f32 %v227, %v451
    %v484 = vmul.f32 %v228, %v452
    %v485 = vmul.f32 %v229, %v453
    %v486 = vmul.f32 %v230, %v454
    %v487 = vmul.f32 %v231, %v455
    %v488 = vmul.f32 %v232, %v456
    %v489 = vmul.f32 %v233, %v457
    %v490 = vlaneseq
    %v491 = vshrl.u32 %v490, 7
    %v492 = vsub.s32 0, %v491
    %v493 = vrot.slane %v70, %v492
    %v494 = vmul.f32 %v458, %v493
    %v495 = vmul.f32 %v459, %v493
    %v496 = vmul.f32 %v460, %v493
    %v497 = vmul.f32 %v461, %v493
    %v498 = vmul.f32 %v462, %v493
    %v499 = vmul.f32 %v463, %v493
    %v500 = vmul.f32 %v464, %v493
    %v501 = vmul.f32 %v465, %v493
    %v502 = vmul.f32 %v466, %v493
    %v503 = vmul.f32 %v467, %v493
    %v504 = vmul.f32 %v468, %v493
    %v505 = vmul.f32 %v469, %v493
    %v506 = vmul.f32 %v470, %v493
    %v507 = vmul.f32 %v471, %v493
    %v508 = vmul.f32 %v472, %v493
    %v509 = vmul.f32 %v473, %v493
    %v510 = vmul.f32 %v474, %v493
    %v511 = vmul.f32 %v475, %v493
    %v512 = vmul.f32 %v476, %v493
    %v513 = vmul.f32 %v477, %v493
    %v514 = vmul.f32 %v478, %v493
    %v515 = vmul.f32 %v479, %v493
    %v516 = vmul.f32 %v480, %v493
    %v517 = vmul.f32 %v481, %v493
    %v518 = vmul.f32 %v482, %v493
    %v519 = vmul.f32 %v483, %v493
    %v520 = vmul.f32 %v484, %v493
    %v521 = vmul.f32 %v485, %v493
    %v522 = vmul.f32 %v486, %v493
    %v523 = vmul.f32 %v487, %v493
    %v524 = vmul.f32 %v488, %v493
    %v525 = vmul.f32 %v489, %v493
    %v526 = vlaneseq
    %v527 = vshrl.u32 %v526, 7
    %v528 = vsub.s32 1, %v527
    %v529 = vrot.slane %v70, %v528
    %v530 = vadd.f32 %v494, %v529
    %v531 = vadd.f32 %v495, %v529
    %v532 = vadd.f32 %v496, %v529
    %v533 = vadd.f32 %v497, %v529
    %v534 = vadd.f32 %v498, %v529
    %v535 = vadd.f32 %v499, %v529
    %v536 = vadd.f32 %v500, %v529
    %v537 = vadd.f32 %v501, %v529
    %v538 = vadd.f32 %v502, %v529
    %v539 = vadd.f32 %v503, %v529
    %v540 = vadd.f32 %v504, %v529
    %v541 = vadd.f32 %v505, %v529
    %v542 = vadd.f32 %v506, %v529
    %v543 = vadd.f32 %v507, %v529
    %v544 = vadd.f32 %v508, %v529
    %v545 = vadd.f32 %v509, %v529
    %v546 = vadd.f32 %v510, %v529
    %v547 = vadd.f32 %v511, %v529
    %v548 = vadd.f32 %v512, %v529
    %v549 = vadd.f32 %v513, %v529
    %v550 = vadd.f32 %v514, %v529
    %v551 = vadd.f32 %v515, %v529
    %v552 = vadd.f32 %v516, %v529
    %v553 = vadd.f32 %v517, %v529
    %v554 = vadd.f32 %v518, %v529
    %v555 = vadd.f32 %v519, %v529
    %v556 = vadd.f32 %v520, %v529
    %v557 = vadd.f32 %v521, %v529
    %v558 = vadd.f32 %v522, %v529
    %v559 = vadd.f32 %v523, %v529
    %v560 = vadd.f32 %v524, %v529
    %v561 = vadd.f32 %v525, %v529
    %v562 = vpack.c.bf16 %v531, %v530
    %v563 = vpack.c.bf16 %v533, %v532
    %v564 = vpack.c.bf16 %v535, %v534
    %v565 = vpack.c.bf16 %v537, %v536
    %v566 = vpack.c.bf16 %v539, %v538
    %v567 = vpack.c.bf16 %v541, %v540
    %v568 = vpack.c.bf16 %v543, %v542
    %v569 = vpack.c.bf16 %v545, %v544
    %v570 = vpack.c.bf16 %v547, %v546
    %v571 = vpack.c.bf16 %v549, %v548
    %v572 = vpack.c.bf16 %v551, %v550
    %v573 = vpack.c.bf16 %v553, %v552
    %v574 = vpack.c.bf16 %v555, %v554
    %v575 = vpack.c.bf16 %v557, %v556
    %v576 = vpack.c.bf16 %v559, %v558
    %v577 = vpack.c.bf16 %v561, %v560
    %v578 = vld [vmem:[%s2] sm:$0xf]
    %v579 = vld [vmem:[%s2 + $0x4] sm:$0xf]
    %v580 = vld [vmem:[%s2 + $0x8] sm:$0xf]
    %v581 = vld [vmem:[%s2 + $0xc] sm:$0xf]
    %v582 = vlaneseq
    %v583 = vshrl.u32 %v582, 7
    %v584 = vsub.s32 0, %v583
    %v585 = vrot.slane %v71, %v584
    %v590 = vunpack.c.l.b16 %v578
    %v591 = vunpack.c.l.b16 %v579
    %v592 = vunpack.c.l.b16 %v580
    %v593 = vunpack.c.l.b16 %v581
    %v594 = vpack.c.b16 %v591, %v590
    %v595 = vpack.c.b16 %v593, %v592
    %v599 = vsel %vm72, %v562, 0
    %v602 = vsel %vm72, %v563, 0
    %v605 = vsel %vm72, %v564, 0
    %v608 = vsel %vm72, %v565, 0
    %v611 = vsel %vm72, %v566, 0
    %v614 = vsel %vm72, %v567, 0
    %v617 = vsel %vm72, %v568, 0
    %v620 = vsel %vm72, %v569, 0
    %v623 = vsel %vm72, %v570, 0
    %v626 = vsel %vm72, %v571, 0
    %v629 = vsel %vm72, %v572, 0
    %v632 = vsel %vm72, %v573, 0
    %v635 = vsel %vm72, %v574, 0
    %v638 = vsel %vm72, %v575, 0
    %v641 = vsel %vm72, %v576, 0
    %v644 = vsel %vm72, %v577, 0
    %646 = vmatprep.subr.bf16.mxu0 0
    %647 = vmatpush1.bf16.msra.mxu0 %v594
    %648 = vmatprep.subr.bf16.mxu0 0
    %649 = vmatpush1.bf16.msra.mxu0 %v595
    %650 = vmatprep.subr.bf16.mxu0 0
    %651 = vmatpush1.bf16.msra.mxu0 0
    %652 = vmatprep.subr.bf16.mxu0 0
    %653 = vmatpush1.bf16.msra.mxu0 0
    %654 = vmatprep.subr.bf16.mxu0 0
    %655 = vmatpush1.bf16.msra.mxu0 0
    %656 = vmatprep.subr.bf16.mxu0 0
    %657 = vmatpush1.bf16.msra.mxu0 0
    %658 = vmatprep.subr.bf16.mxu0 0
    %659 = vmatpush1.bf16.msra.mxu0 0
    %660 = vmatprep.subr.bf16.mxu0 0
    %661 = vmatpush1.bf16.msra.mxu0 0
    %662 = vmatprep.subr.bf16.mxu0 0
    %663 = vmatpush1.bf16.msra.mxu0 0
    %664 = vmatprep.subr.bf16.mxu0 0
    %665 = vmatpush1.bf16.msra.mxu0 0
    %666 = vmatprep.subr.bf16.mxu0 0
    %667 = vmatpush1.bf16.msra.mxu0 0
    %668 = vmatprep.subr.bf16.mxu0 0
    %669 = vmatpush1.bf16.msra.mxu0 0
    %670 = vmatprep.subr.bf16.mxu0 0
    %671 = vmatpush1.bf16.msra.mxu0 0
    %672 = vmatprep.subr.bf16.mxu0 0
    %673 = vmatpush1.bf16.msra.mxu0 0
    %674 = vmatprep.subr.bf16.mxu0 0
    %675 = vmatpush1.bf16.msra.mxu0 0
    %676 = vmatprep.subr.bf16.mxu0 0
    %677 = vmatpush1.bf16.msra.mxu0 0
    %678 = vmatprep.mubr.bf16.mxu0 0
    %679 = vmatmul.mubr.bf16.gmra.mrb[0].mxu0 %v599
    %v680 = vpop.f32.mrb[0].mxu0
    %v681 = vadd.f32 %v585, %v680
    %v682 = vpop.f32.mrb[0].mxu0
    %v683 = vpop.f32.mrb[0].mxu0
    %v684 = vadd.f32 %v585, %v683
    %v685 = vpop.f32.mrb[0].mxu0
    %686 = vmatprep.mubr.bf16.mxu0 0
    %687 = vmatmul.mubr.bf16.gmra.mrb[0].mxu0 %v602
    %v688 = vpop.f32.mrb[0].mxu0
    %v689 = vadd.f32 %v585, %v688
    %v690 = vpop.f32.mrb[0].mxu0
    %v691 = vpop.f32.mrb[0].mxu0
    %v692 = vadd.f32 %v585, %v691
    %v693 = vpop.f32.mrb[0].mxu0
    %694 = vmatprep.mubr.bf16.mxu0 0
    %695 = vmatmul.mubr.bf16.gmra.mrb[0].mxu0 %v605
    %v696 = vpop.f32.mrb[0].mxu0
    %v697 = vadd.f32 %v585, %v696
    %v698 = vpop.f32.mrb[0].mxu0
    %v699 = vpop.f32.mrb[0].mxu0
    %v700 = vadd.f32 %v585, %v699
    %v701 = vpop.f32.mrb[0].mxu0
    %702 = vmatprep.mubr.bf16.mxu0 0
    %703 = vmatmul.mubr.bf16.gmra.mrb[0].mxu0 %v608
    %v704 = vpop.f32.mrb[0].mxu0
    %v705 = vadd.f32 %v585, %v704
    %v706 = vpop.f32.mrb[0].mxu0
    %v707 = vpop.f32.mrb[0].mxu0
    %v708 = vadd.f32 %v585, %v707
    %v709 = vpop.f32.mrb[0].mxu0
    %710 = vmatprep.mubr.bf16.mxu0 0
    %711 = vmatmul.mubr.bf16.gmra.mrb[0].mxu0 %v611
    %v712 = vpop.f32.mrb[0].mxu0
    %v713 = vadd.f32 %v585, %v712
    %v714 = vpop.f32.mrb[0].mxu0
    %v715 = vpop.f32.mrb[0].mxu0
    %v716 = vadd.f32 %v585, %v715
    %v717 = vpop.f32.mrb[0].mxu0
    %718 = vmatprep.mubr.bf16.mxu0 0
    %719 = vmatmul.mubr.bf16.gmra.mrb[0].mxu0 %v614
    %v720 = vpop.f32.mrb[0].mxu0
    %v721 = vadd.f32 %v585, %v720
    %v722 = vpop.f32.mrb[0].mxu0
    %v723 = vpop.f32.mrb[0].mxu0
    %v724 = vadd.f32 %v585, %v723
    %v725 = vpop.f32.mrb[0].mxu0
    %726 = vmatprep.mubr.bf16.mxu0 0
    %727 = vmatmul.mubr.bf16.gmra.mrb[0].mxu0 %v617
    %v728 = vpop.f32.mrb[0].mxu0
    %v729 = vadd.f32 %v585, %v728
    %v730 = vpop.f32.mrb[0].mxu0
    %v731 = vpop.f32.mrb[0].mxu0
    %v732 = vadd.f32 %v585, %v731
    %v733 = vpop.f32.mrb[0].mxu0
    %734 = vmatprep.mubr.bf16.mxu0 0
    %735 = vmatmul.mubr.bf16.gmra.mrb[0].mxu0 %v620
    %v736 = vpop.f32.mrb[0].mxu0
    %v737 = vadd.f32 %v585, %v736
    %v738 = vpop.f32.mrb[0].mxu0
    %v739 = vpop.f32.mrb[0].mxu0
    %v740 = vadd.f32 %v585, %v739
    %v741 = vpop.f32.mrb[0].mxu0
    %742 = vmatprep.mubr.bf16.mxu0 0
    %743 = vmatmul.mubr.bf16.gmra.mrb[0].mxu0 %v623
    %v744 = vpop.f32.mrb[0].mxu0
    %v745 = vadd.f32 %v585, %v744
    %v746 = vpop.f32.mrb[0].mxu0
    %v747 = vpop.f32.mrb[0].mxu0
    %v748 = vadd.f32 %v585, %v747
    %v749 = vpop.f32.mrb[0].mxu0
    %750 = vmatprep.mubr.bf16.mxu0 0
    %751 = vmatmul.mubr.bf16.gmra.mrb[0].mxu0 %v626
    %v752 = vpop.f32.mrb[0].mxu0
    %v753 = vadd.f32 %v585, %v752
    %v754 = vpop.f32.mrb[0].mxu0
    %v755 = vpop.f32.mrb[0].mxu0
    %v756 = vadd.f32 %v585, %v755
    %v757 = vpop.f32.mrb[0].mxu0
    %758 = vmatprep.mubr.bf16.mxu0 0
    %759 = vmatmul.mubr.bf16.gmra.mrb[0].mxu0 %v629
    %v760 = vpop.f32.mrb[0].mxu0
    %v761 = vadd.f32 %v585, %v760
    %v762 = vpop.f32.mrb[0].mxu0
    %v763 = vpop.f32.mrb[0].mxu0
    %v764 = vadd.f32 %v585, %v763
    %v765 = vpop.f32.mrb[0].mxu0
    %766 = vmatprep.mubr.bf16.mxu0 0
    %767 = vmatmul.mubr.bf16.gmra.mrb[0].mxu0 %v632
    %v768 = vpop.f32.mrb[0].mxu0
    %v769 = vadd.f32 %v585, %v768
    %v770 = vpop.f32.mrb[0].mxu0
    %v771 = vpop.f32.mrb[0].mxu0
    %v772 = vadd.f32 %v585, %v771
    %v773 = vpop.f32.mrb[0].mxu0
    %774 = vmatprep.mubr.bf16.mxu0 0
    %775 = vmatmul.mubr.bf16.gmra.mrb[0].mxu0 %v635
    %v776 = vpop.f32.mrb[0].mxu0
    %v777 = vadd.f32 %v585, %v776
    %v778 = vpop.f32.mrb[0].mxu0
    %v779 = vpop.f32.mrb[0].mxu0
    %v780 = vadd.f32 %v585, %v779
    %v781 = vpop.f32.mrb[0].mxu0
    %782 = vmatprep.mubr.bf16.mxu0 0
    %783 = vmatmul.mubr.bf16.gmra.mrb[0].mxu0 %v638
    %v784 = vpop.f32.mrb[0].mxu0
    %v785 = vadd.f32 %v585, %v784
    %v786 = vpop.f32.mrb[0].mxu0
    %v787 = vpop.f32.mrb[0].mxu0
    %v788 = vadd.f32 %v585, %v787
    %v789 = vpop.f32.mrb[0].mxu0
    %790 = vmatprep.mubr.bf16.mxu0 0
    %791 = vmatmul.mubr.bf16.gmra.mrb[0].mxu0 %v641
    %v792 = vpop.f32.mrb[0].mxu0
    %v793 = vadd.f32 %v585, %v792
    %v794 = vpop.f32.mrb[0].mxu0
    %v795 = vpop.f32.mrb[0].mxu0
    %v796 = vadd.f32 %v585, %v795
    %v797 = vpop.f32.mrb[0].mxu0
    %798 = vmatprep.mubr.bf16.mxu0 0
    %799 = vmatmul.mubr.bf16.gmra.mrb[0].mxu0 %v644
    %v800 = vpop.f32.mrb[0].mxu0
    %v801 = vadd.f32 %v585, %v800
    %v802 = vpop.f32.mrb[0].mxu0
    %v803 = vpop.f32.mrb[0].mxu0
    %v804 = vadd.f32 %v585, %v803
    %v805 = vpop.f32.mrb[0].mxu0
    %806 = vdwg.mxu0
    %v807 = vmul.f32 %v681, 0.5
    %v808 = vmul.f32 %v684, 0.5
    %v809 = vmul.f32 %v689, 0.5
    %v810 = vmul.f32 %v692, 0.5
    %v811 = vmul.f32 %v697, 0.5
    %v812 = vmul.f32 %v700, 0.5
    %v813 = vmul.f32 %v705, 0.5
    %v814 = vmul.f32 %v708, 0.5
    %v815 = vmul.f32 %v713, 0.5
    %v816 = vmul.f32 %v716, 0.5
    %v817 = vmul.f32 %v721, 0.5
    %v818 = vmul.f32 %v724, 0.5
    %v819 = vmul.f32 %v729, 0.5
    %v820 = vmul.f32 %v732, 0.5
    %v821 = vmul.f32 %v737, 0.5
    %v822 = vmul.f32 %v740, 0.5
    %v823 = vmul.f32 %v745, 0.5
    %v824 = vmul.f32 %v748, 0.5
    %v825 = vmul.f32 %v753, 0.5
    %v826 = vmul.f32 %v756, 0.5
    %v827 = vmul.f32 %v761, 0.5
    %v828 = vmul.f32 %v764, 0.5
    %v829 = vmul.f32 %v769, 0.5
    %v830 = vmul.f32 %v772, 0.5
    %v831 = vmul.f32 %v777, 0.5
    %v832 = vmul.f32 %v780, 0.5
    %v833 = vmul.f32 %v785, 0.5
    %v834 = vmul.f32 %v788, 0.5
    %v835 = vmul.f32 %v793, 0.5
    %v836 = vmul.f32 %v796, 0.5
    %v837 = vmul.f32 %v801, 0.5
    %v838 = vmul.f32 %v804, 0.5
    %v839 = vmul.f32 %v681, 0.70710677
    %v840 = vmul.f32 %v684, 0.70710677
    %v841 = vmul.f32 %v689, 0.70710677
    %v842 = vmul.f32 %v692, 0.70710677
    %v843 = vmul.f32 %v697, 0.70710677
    %v844 = vmul.f32 %v700, 0.70710677
    %v845 = vmul.f32 %v705, 0.70710677
    %v846 = vmul.f32 %v708, 0.70710677
    %v847 = vmul.f32 %v713, 0.70710677
    %v848 = vmul.f32 %v716, 0.70710677
    %v849 = vmul.f32 %v721, 0.70710677
    %v850 = vmul.f32 %v724, 0.70710677
    %v851 = vmul.f32 %v729, 0.70710677
    %v852 = vmul.f32 %v732, 0.70710677
    %v853 = vmul.f32 %v737, 0.70710677
    %v854 = vmul.f32 %v740, 0.70710677
    %v855 = vmul.f32 %v745, 0.70710677
    %v856 = vmul.f32 %v748, 0.70710677
    %v857 = vmul.f32 %v753, 0.70710677
    %v858 = vmul.f32 %v756, 0.70710677
    %v859 = vmul.f32 %v761, 0.70710677
    %v860 = vmul.f32 %v764, 0.70710677
    %v861 = vmul.f32 %v769, 0.70710677
    %v862 = vmul.f32 %v772, 0.70710677
    %v863 = vmul.f32 %v777, 0.70710677
    %v864 = vmul.f32 %v780, 0.70710677
    %v865 = vmul.f32 %v785, 0.70710677
    %v866 = vmul.f32 %v788, 0.70710677
    %v867 = vmul.f32 %v793, 0.70710677
    %v868 = vmul.f32 %v796, 0.70710677
    %v869 = vmul.f32 %v801, 0.70710677
    %v870 = vmul.f32 %v804, 0.70710677
    %v871 = verf.f32.pop %v839
    %v872 = verf.f32.pop %v840
    %v873 = verf.f32.pop %v841
    %v874 = verf.f32.pop %v842
    %v875 = verf.f32.pop %v843
    %v876 = verf.f32.pop %v844
    %v877 = verf.f32.pop %v845
    %v878 = verf.f32.pop %v846
    %v879 = verf.f32.pop %v847
    %v880 = verf.f32.pop %v848
    %v881 = verf.f32.pop %v849
    %v882 = verf.f32.pop %v850
    %v883 = verf.f32.pop %v851
    %v884 = verf.f32.pop %v852
    %v885 = verf.f32.pop %v853
    %v886 = verf.f32.pop %v854
    %v887 = verf.f32.pop %v855
    %v888 = verf.f32.pop %v856
    %v889 = verf.f32.pop %v857
    %v890 = verf.f32.pop %v858
    %v891 = verf.f32.pop %v859
    %v892 = verf.f32.pop %v860
    %v893 = verf.f32.pop %v861
    %v894 = verf.f32.pop %v862
    %v895 = verf.f32.pop %v863
    %v896 = verf.f32.pop %v864
    %v897 = verf.f32.pop %v865
    %v898 = verf.f32.pop %v866
    %v899 = verf.f32.pop %v867
    %v900 = verf.f32.pop %v868
    %v901 = verf.f32.pop %v869
    %v902 = verf.f32.pop %v870
    %v903 = vadd.f32 %v871, 1.0
    %v904 = vadd.f32 %v872, 1.0
    %v905 = vadd.f32 %v873, 1.0
    %v906 = vadd.f32 %v874, 1.0
    %v907 = vadd.f32 %v875, 1.0
    %v908 = vadd.f32 %v876, 1.0
    %v909 = vadd.f32 %v877, 1.0
    %v910 = vadd.f32 %v878, 1.0
    %v911 = vadd.f32 %v879, 1.0
    %v912 = vadd.f32 %v880, 1.0
    %v913 = vadd.f32 %v881, 1.0
    %v914 = vadd.f32 %v882, 1.0
    %v915 = vadd.f32 %v883, 1.0
    %v916 = vadd.f32 %v884, 1.0
    %v917 = vadd.f32 %v885, 1.0
    %v918 = vadd.f32 %v886, 1.0
    %v919 = vadd.f32 %v887, 1.0
    %v920 = vadd.f32 %v888, 1.0
    %v921 = vadd.f32 %v889, 1.0
    %v922 = vadd.f32 %v890, 1.0
    %v923 = vadd.f32 %v891, 1.0
    %v924 = vadd.f32 %v892, 1.0
    %v925 = vadd.f32 %v893, 1.0
    %v926 = vadd.f32 %v894, 1.0
    %v927 = vadd.f32 %v895, 1.0
    %v928 = vadd.f32 %v896, 1.0
    %v929 = vadd.f32 %v897, 1.0
    %v930 = vadd.f32 %v898, 1.0
    %v931 = vadd.f32 %v899, 1.0
    %v932 = vadd.f32 %v900, 1.0
    %v933 = vadd.f32 %v901, 1.0
    %v934 = vadd.f32 %v902, 1.0
    %v935 = vmul.f32 %v807, %v903
    %v936 = vmul.f32 %v808, %v904
    %v937 = vmul.f32 %v809, %v905
    %v938 = vmul.f32 %v810, %v906
    %v939 = vmul.f32 %v811, %v907
    %v940 = vmul.f32 %v812, %v908
    %v941 = vmul.f32 %v813, %v909
    %v942 = vmul.f32 %v814, %v910
    %v943 = vmul.f32 %v815, %v911
    %v944 = vmul.f32 %v816, %v912
    %v945 = vmul.f32 %v817, %v913
    %v946 = vmul.f32 %v818, %v914
    %v947 = vmul.f32 %v819, %v915
    %v948 = vmul.f32 %v820, %v916
    %v949 = vmul.f32 %v821, %v917
    %v950 = vmul.f32 %v822, %v918
    %v951 = vmul.f32 %v823, %v919
    %v952 = vmul.f32 %v824, %v920
    %v953 = vmul.f32 %v825, %v921
    %v954 = vmul.f32 %v826, %v922
    %v955 = vmul.f32 %v827, %v923
    %v956 = vmul.f32 %v828, %v924
    %v957 = vmul.f32 %v829, %v925
    %v958 = vmul.f32 %v830, %v926
    %v959 = vmul.f32 %v831, %v927
    %v960 = vmul.f32 %v832, %v928
    %v961 = vmul.f32 %v833, %v929
    %v962 = vmul.f32 %v834, %v930
    %v963 = vmul.f32 %v835, %v931
    %v964 = vmul.f32 %v836, %v932
    %v965 = vmul.f32 %v837, %v933
    %v966 = vmul.f32 %v838, %v934
    %v967 = vpack.c.bf16 %v936, %v935
    %v968 = vpack.c.bf16 %v938, %v937
    %v969 = vpack.c.bf16 %v940, %v939
    %v970 = vpack.c.bf16 %v942, %v941
    %v971 = vpack.c.bf16 %v944, %v943
    %v972 = vpack.c.bf16 %v946, %v945
    %v973 = vpack.c.bf16 %v948, %v947
    %v974 = vpack.c.bf16 %v950, %v949
    %v975 = vpack.c.bf16 %v952, %v951
    %v976 = vpack.c.bf16 %v954, %v953
    %v977 = vpack.c.bf16 %v956, %v955
    %v978 = vpack.c.bf16 %v958, %v957
    %v979 = vpack.c.bf16 %v960, %v959
    %v980 = vpack.c.bf16 %v962, %v961
    %v981 = vpack.c.bf16 %v964, %v963
    %v982 = vpack.c.bf16 %v966, %v965
    %v983 = vld [vmem:[%s3] sm:$0xf]
    %v984 = vld [vmem:[%s3 + $0x4] sm:$0xf]
    %v985 = vld [vmem:[%s3 + $0x8] sm:$0xf]
    %v986 = vld [vmem:[%s3 + $0xc] sm:$0xf]
    %v991 = vunpack.c.l.b16 %v983
    %v992 = vunpack.c.l.b16 %v984
    %v993 = vunpack.c.l.b16 %v985
    %v994 = vunpack.c.l.b16 %v986
    %v995 = vpack.c.b16 %v992, %v991
    %v996 = vpack.c.b16 %v994, %v993
    %v1000 = vsel %vm72, %v967, 0
    %v1003 = vsel %vm72, %v968, 0
    %v1006 = vsel %vm72, %v969, 0
    %v1009 = vsel %vm72, %v970, 0
    %v1012 = vsel %vm72, %v971, 0
    %v1015 = vsel %vm72, %v972, 0
    %v1018 = vsel %vm72, %v973, 0
    %v1021 = vsel %vm72, %v974, 0
    %v1024 = vsel %vm72, %v975, 0
    %v1027 = vsel %vm72, %v976, 0
    %v1030 = vsel %vm72, %v977, 0
    %v1033 = vsel %vm72, %v978, 0
    %v1036 = vsel %vm72, %v979, 0
    %v1039 = vsel %vm72, %v980, 0
    %v1042 = vsel %vm72, %v981, 0
    %v1045 = vsel %vm72, %v982, 0
    %1047 = vmatprep.subr.bf16.mxu0 0
    %1048 = vmatpush1.bf16.msra.mxu0 %v995
    %1049 = vmatprep.subr.bf16.mxu0 0
    %1050 = vmatpush1.bf16.msra.mxu0 %v996
    %1051 = vmatprep.subr.bf16.mxu0 0
    %1052 = vmatpush1.bf16.msra.mxu0 0
    %1053 = vmatprep.subr.bf16.mxu0 0
    %1054 = vmatpush1.bf16.msra.mxu0 0
    %1055 = vmatprep.subr.bf16.mxu0 0
    %1056 = vmatpush1.bf16.msra.mxu0 0
    %1057 = vmatprep.subr.bf16.mxu0 0
    %1058 = vmatpush1.bf16.msra.mxu0 0
    %1059 = vmatprep.subr.bf16.mxu0 0
    %1060 = vmatpush1.bf16.msra.mxu0 0
    %1061 = vmatprep.subr.bf16.mxu0 0
    %1062 = vmatpush1.bf16.msra.mxu0 0
    %1063 = vmatprep.subr.bf16.mxu0 0
    %1064 = vmatpush1.bf16.msra.mxu0 0
    %1065 = vmatprep.subr.bf16.mxu0 0
    %1066 = vmatpush1.bf16.msra.mxu0 0
    %1067 = vmatprep.subr.bf16.mxu0 0
    %1068 = vmatpush1.bf16.msra.mxu0 0
    %1069 = vmatprep.subr.bf16.mxu0 0
    %1070 = vmatpush1.bf16.msra.mxu0 0
    %1071 = vmatprep.subr.bf16.mxu0 0
    %1072 = vmatpush1.bf16.msra.mxu0 0
    %1073 = vmatprep.subr.bf16.mxu0 0
    %1074 = vmatpush1.bf16.msra.mxu0 0
    %1075 = vmatprep.subr.bf16.mxu0 0
    %1076 = vmatpush1.bf16.msra.mxu0 0
    %1077 = vmatprep.subr.bf16.mxu0 0
    %1078 = vmatpush1.bf16.msra.mxu0 0
    %1079 = vmatprep.mubr.bf16.mxu0 0
    %1080 = vmatmul.mubr.bf16.gmra.mrb[0].mxu0 %v1000
    %v1081 = vpop.f32.mrb[0].mxu0
    %v1082 = vadd.f32 0.0, %v1081
    %v1083 = vpop.f32.mrb[0].mxu0
    %v1084 = vpop.f32.mrb[0].mxu0
    %v1085 = vadd.f32 0.0, %v1084
    %v1086 = vpop.f32.mrb[0].mxu0
    %1087 = vmatprep.mubr.bf16.mxu0 0
    %1088 = vmatmul.mubr.bf16.gmra.mrb[0].mxu0 %v1003
    %v1089 = vpop.f32.mrb[0].mxu0
    %v1090 = vadd.f32 0.0, %v1089
    %v1091 = vpop.f32.mrb[0].mxu0
    %v1092 = vpop.f32.mrb[0].mxu0
    %v1093 = vadd.f32 0.0, %v1092
    %v1094 = vpop.f32.mrb[0].mxu0
    %1095 = vmatprep.mubr.bf16.mxu0 0
    %1096 = vmatmul.mubr.bf16.gmra.mrb[0].mxu0 %v1006
    %v1097 = vpop.f32.mrb[0].mxu0
    %v1098 = vadd.f32 0.0, %v1097
    %v1099 = vpop.f32.mrb[0].mxu0
    %v1100 = vpop.f32.mrb[0].mxu0
    %v1101 = vadd.f32 0.0, %v1100
    %v1102 = vpop.f32.mrb[0].mxu0
    %1103 = vmatprep.mubr.bf16.mxu0 0
    %1104 = vmatmul.mubr.bf16.gmra.mrb[0].mxu0 %v1009
    %v1105 = vpop.f32.mrb[0].mxu0
    %v1106 = vadd.f32 0.0, %v1105
    %v1107 = vpop.f32.mrb[0].mxu0
    %v1108 = vpop.f32.mrb[0].mxu0
    %v1109 = vadd.f32 0.0, %v1108
    %v1110 = vpop.f32.mrb[0].mxu0
    %1111 = vmatprep.mubr.bf16.mxu0 0
    %1112 = vmatmul.mubr.bf16.gmra.mrb[0].mxu0 %v1012
    %v1113 = vpop.f32.mrb[0].mxu0
    %v1114 = vadd.f32 0.0, %v1113
    %v1115 = vpop.f32.mrb[0].mxu0
    %v1116 = vpop.f32.mrb[0].mxu0
    %v1117 = vadd.f32 0.0, %v1116
    %v1118 = vpop.f32.mrb[0].mxu0
    %1119 = vmatprep.mubr.bf16.mxu0 0
    %1120 = vmatmul.mubr.bf16.gmra.mrb[0].mxu0 %v1015
    %v1121 = vpop.f32.mrb[0].mxu0
    %v1122 = vadd.f32 0.0, %v1121
    %v1123 = vpop.f32.mrb[0].mxu0
    %v1124 = vpop.f32.mrb[0].mxu0
    %v1125 = vadd.f32 0.0, %v1124
    %v1126 = vpop.f32.mrb[0].mxu0
    %1127 = vmatprep.mubr.bf16.mxu0 0
    %1128 = vmatmul.mubr.bf16.gmra.mrb[0].mxu0 %v1018
    %v1129 = vpop.f32.mrb[0].mxu0
    %v1130 = vadd.f32 0.0, %v1129
    %v1131 = vpop.f32.mrb[0].mxu0
    %v1132 = vpop.f32.mrb[0].mxu0
    %v1133 = vadd.f32 0.0, %v1132
    %v1134 = vpop.f32.mrb[0].mxu0
    %1135 = vmatprep.mubr.bf16.mxu0 0
    %1136 = vmatmul.mubr.bf16.gmra.mrb[0].mxu0 %v1021
    %v1137 = vpop.f32.mrb[0].mxu0
    %v1138 = vadd.f32 0.0, %v1137
    %v1139 = vpop.f32.mrb[0].mxu0
    %v1140 = vpop.f32.mrb[0].mxu0
    %v1141 = vadd.f32 0.0, %v1140
    %v1142 = vpop.f32.mrb[0].mxu0
    %1143 = vmatprep.mubr.bf16.mxu0 0
    %1144 = vmatmul.mubr.bf16.gmra.mrb[0].mxu0 %v1024
    %v1145 = vpop.f32.mrb[0].mxu0
    %v1146 = vadd.f32 0.0, %v1145
    %v1147 = vpop.f32.mrb[0].mxu0
    %v1148 = vpop.f32.mrb[0].mxu0
    %v1149 = vadd.f32 0.0, %v1148
    %v1150 = vpop.f32.mrb[0].mxu0
    %1151 = vmatprep.mubr.bf16.mxu0 0
    %1152 = vmatmul.mubr.bf16.gmra.mrb[0].mxu0 %v1027
    %v1153 = vpop.f32.mrb[0].mxu0
    %v1154 = vadd.f32 0.0, %v1153
    %v1155 = vpop.f32.mrb[0].mxu0
    %v1156 = vpop.f32.mrb[0].mxu0
    %v1157 = vadd.f32 0.0, %v1156
    %v1158 = vpop.f32.mrb[0].mxu0
    %1159 = vmatprep.mubr.bf16.mxu0 0
    %1160 = vmatmul.mubr.bf16.gmra.mrb[0].mxu0 %v1030
    %v1161 = vpop.f32.mrb[0].mxu0
    %v1162 = vadd.f32 0.0, %v1161
    %v1163 = vpop.f32.mrb[0].mxu0
    %v1164 = vpop.f32.mrb[0].mxu0
    %v1165 = vadd.f32 0.0, %v1164
    %v1166 = vpop.f32.mrb[0].mxu0
    %1167 = vmatprep.mubr.bf16.mxu0 0
    %1168 = vmatmul.mubr.bf16.gmra.mrb[0].mxu0 %v1033
    %v1169 = vpop.f32.mrb[0].mxu0
    %v1170 = vadd.f32 0.0, %v1169
    %v1171 = vpop.f32.mrb[0].mxu0
    %v1172 = vpop.f32.mrb[0].mxu0
    %v1173 = vadd.f32 0.0, %v1172
    %v1174 = vpop.f32.mrb[0].mxu0
    %1175 = vmatprep.mubr.bf16.mxu0 0
    %1176 = vmatmul.mubr.bf16.gmra.mrb[0].mxu0 %v1036
    %v1177 = vpop.f32.mrb[0].mxu0
    %v1178 = vadd.f32 0.0, %v1177
    %v1179 = vpop.f32.mrb[0].mxu0
    %v1180 = vpop.f32.mrb[0].mxu0
    %v1181 = vadd.f32 0.0, %v1180
    %v1182 = vpop.f32.mrb[0].mxu0
    %1183 = vmatprep.mubr.bf16.mxu0 0
    %1184 = vmatmul.mubr.bf16.gmra.mrb[0].mxu0 %v1039
    %v1185 = vpop.f32.mrb[0].mxu0
    %v1186 = vadd.f32 0.0, %v1185
    %v1187 = vpop.f32.mrb[0].mxu0
    %v1188 = vpop.f32.mrb[0].mxu0
    %v1189 = vadd.f32 0.0, %v1188
    %v1190 = vpop.f32.mrb[0].mxu0
    %1191 = vmatprep.mubr.bf16.mxu0 0
    %1192 = vmatmul.mubr.bf16.gmra.mrb[0].mxu0 %v1042
    %v1193 = vpop.f32.mrb[0].mxu0
    %v1194 = vadd.f32 0.0, %v1193
    %v1195 = vpop.f32.mrb[0].mxu0
    %v1196 = vpop.f32.mrb[0].mxu0
    %v1197 = vadd.f32 0.0, %v1196
    %v1198 = vpop.f32.mrb[0].mxu0
    %1199 = vmatprep.mubr.bf16.mxu0 0
    %1200 = vmatmul.mubr.bf16.gmra.mrb[0].mxu0 %v1045
    %v1201 = vpop.f32.mrb[0].mxu0
    %v1202 = vadd.f32 0.0, %v1201
    %v1203 = vpop.f32.mrb[0].mxu0
    %v1204 = vpop.f32.mrb[0].mxu0
    %v1205 = vadd.f32 0.0, %v1204
    %v1206 = vpop.f32.mrb[0].mxu0
    %1207 = vdwg.mxu0
    %v1208 = vsel %vm72, %v935, 0.0
    %v1209 = vrot.slane %v1208, 4
    %v1210 = vadd.f32 %v1208, %v1209
    %v1211 = vrot.slane %v1210, 2
    %v1212 = vadd.f32 %v1210, %v1211
    %v1213 = vrot.slane %v1212, 1
    %v1214 = vadd.f32 %v1212, %v1213
    %v1215 = vsel %vm72, %v936, 0.0
    %v1216 = vrot.slane %v1215, 4
    %v1217 = vadd.f32 %v1215, %v1216
    %v1218 = vrot.slane %v1217, 2
    %v1219 = vadd.f32 %v1217, %v1218
    %v1220 = vrot.slane %v1219, 1
    %v1221 = vadd.f32 %v1219, %v1220
    %v1222 = vsel %vm72, %v937, 0.0
    %v1223 = vrot.slane %v1222, 4
    %v1224 = vadd.f32 %v1222, %v1223
    %v1225 = vrot.slane %v1224, 2
    %v1226 = vadd.f32 %v1224, %v1225
    %v1227 = vrot.slane %v1226, 1
    %v1228 = vadd.f32 %v1226, %v1227
    %v1229 = vsel %vm72, %v938, 0.0
    %v1230 = vrot.slane %v1229, 4
    %v1231 = vadd.f32 %v1229, %v1230
    %v1232 = vrot.slane %v1231, 2
    %v1233 = vadd.f32 %v1231, %v1232
    %v1234 = vrot.slane %v1233, 1
    %v1235 = vadd.f32 %v1233, %v1234
    %v1236 = vsel %vm72, %v939, 0.0
    %v1237 = vrot.slane %v1236, 4
    %v1238 = vadd.f32 %v1236, %v1237
    %v1239 = vrot.slane %v1238, 2
    %v1240 = vadd.f32 %v1238, %v1239
    %v1241 = vrot.slane %v1240, 1
    %v1242 = vadd.f32 %v1240, %v1241
    %v1243 = vsel %vm72, %v940, 0.0
    %v1244 = vrot.slane %v1243, 4
    %v1245 = vadd.f32 %v1243, %v1244
    %v1246 = vrot.slane %v1245, 2
    %v1247 = vadd.f32 %v1245, %v1246
    %v1248 = vrot.slane %v1247, 1
    %v1249 = vadd.f32 %v1247, %v1248
    %v1250 = vsel %vm72, %v941, 0.0
    %v1251 = vrot.slane %v1250, 4
    %v1252 = vadd.f32 %v1250, %v1251
    %v1253 = vrot.slane %v1252, 2
    %v1254 = vadd.f32 %v1252, %v1253
    %v1255 = vrot.slane %v1254, 1
    %v1256 = vadd.f32 %v1254, %v1255
    %v1257 = vsel %vm72, %v942, 0.0
    %v1258 = vrot.slane %v1257, 4
    %v1259 = vadd.f32 %v1257, %v1258
    %v1260 = vrot.slane %v1259, 2
    %v1261 = vadd.f32 %v1259, %v1260
    %v1262 = vrot.slane %v1261, 1
    %v1263 = vadd.f32 %v1261, %v1262
    %v1264 = vsel %vm72, %v943, 0.0
    %v1265 = vrot.slane %v1264, 4
    %v1266 = vadd.f32 %v1264, %v1265
    %v1267 = vrot.slane %v1266, 2
    %v1268 = vadd.f32 %v1266, %v1267
    %v1269 = vrot.slane %v1268, 1
    %v1270 = vadd.f32 %v1268, %v1269
    %v1271 = vsel %vm72, %v944, 0.0
    %v1272 = vrot.slane %v1271, 4
    %v1273 = vadd.f32 %v1271, %v1272
    %v1274 = vrot.slane %v1273, 2
    %v1275 = vadd.f32 %v1273, %v1274
    %v1276 = vrot.slane %v1275, 1
    %v1277 = vadd.f32 %v1275, %v1276
    %v1278 = vsel %vm72, %v945, 0.0
    %v1279 = vrot.slane %v1278, 4
    %v1280 = vadd.f32 %v1278, %v1279
    %v1281 = vrot.slane %v1280, 2
    %v1282 = vadd.f32 %v1280, %v1281
    %v1283 = vrot.slane %v1282, 1
    %v1284 = vadd.f32 %v1282, %v1283
    %v1285 = vsel %vm72, %v946, 0.0
    %v1286 = vrot.slane %v1285, 4
    %v1287 = vadd.f32 %v1285, %v1286
    %v1288 = vrot.slane %v1287, 2
    %v1289 = vadd.f32 %v1287, %v1288
    %v1290 = vrot.slane %v1289, 1
    %v1291 = vadd.f32 %v1289, %v1290
    %v1292 = vsel %vm72, %v947, 0.0
    %v1293 = vrot.slane %v1292, 4
    %v1294 = vadd.f32 %v1292, %v1293
    %v1295 = vrot.slane %v1294, 2
    %v1296 = vadd.f32 %v1294, %v1295
    %v1297 = vrot.slane %v1296, 1
    %v1298 = vadd.f32 %v1296, %v1297
    %v1299 = vsel %vm72, %v948, 0.0
    %v1300 = vrot.slane %v1299, 4
    %v1301 = vadd.f32 %v1299, %v1300
    %v1302 = vrot.slane %v1301, 2
    %v1303 = vadd.f32 %v1301, %v1302
    %v1304 = vrot.slane %v1303, 1
    %v1305 = vadd.f32 %v1303, %v1304
    %v1306 = vsel %vm72, %v949, 0.0
    %v1307 = vrot.slane %v1306, 4
    %v1308 = vadd.f32 %v1306, %v1307
    %v1309 = vrot.slane %v1308, 2
    %v1310 = vadd.f32 %v1308, %v1309
    %v1311 = vrot.slane %v1310, 1
    %v1312 = vadd.f32 %v1310, %v1311
    %v1313 = vsel %vm72, %v950, 0.0
    %v1314 = vrot.slane %v1313, 4
    %v1315 = vadd.f32 %v1313, %v1314
    %v1316 = vrot.slane %v1315, 2
    %v1317 = vadd.f32 %v1315, %v1316
    %v1318 = vrot.slane %v1317, 1
    %v1319 = vadd.f32 %v1317, %v1318
    %v1320 = vsel %vm72, %v951, 0.0
    %v1321 = vrot.slane %v1320, 4
    %v1322 = vadd.f32 %v1320, %v1321
    %v1323 = vrot.slane %v1322, 2
    %v1324 = vadd.f32 %v1322, %v1323
    %v1325 = vrot.slane %v1324, 1
    %v1326 = vadd.f32 %v1324, %v1325
    %v1327 = vsel %vm72, %v952, 0.0
    %v1328 = vrot.slane %v1327, 4
    %v1329 = vadd.f32 %v1327, %v1328
    %v1330 = vrot.slane %v1329, 2
    %v1331 = vadd.f32 %v1329, %v1330
    %v1332 = vrot.slane %v1331, 1
    %v1333 = vadd.f32 %v1331, %v1332
    %v1334 = vsel %vm72, %v953, 0.0
    %v1335 = vrot.slane %v1334, 4
    %v1336 = vadd.f32 %v1334, %v1335
    %v1337 = vrot.slane %v1336, 2
    %v1338 = vadd.f32 %v1336, %v1337
    %v1339 = vrot.slane %v1338, 1
    %v1340 = vadd.f32 %v1338, %v1339
    %v1341 = vsel %vm72, %v954, 0.0
    %v1342 = vrot.slane %v1341, 4
    %v1343 = vadd.f32 %v1341, %v1342
    %v1344 = vrot.slane %v1343, 2
    %v1345 = vadd.f32 %v1343, %v1344
    %v1346 = vrot.slane %v1345, 1
    %v1347 = vadd.f32 %v1345, %v1346
    %v1348 = vsel %vm72, %v955, 0.0
    %v1349 = vrot.slane %v1348, 4
    %v1350 = vadd.f32 %v1348, %v1349
    %v1351 = vrot.slane %v1350, 2
    %v1352 = vadd.f32 %v1350, %v1351
    %v1353 = vrot.slane %v1352, 1
    %v1354 = vadd.f32 %v1352, %v1353
    %v1355 = vsel %vm72, %v956, 0.0
    %v1356 = vrot.slane %v1355, 4
    %v1357 = vadd.f32 %v1355, %v1356
    %v1358 = vrot.slane %v1357, 2
    %v1359 = vadd.f32 %v1357, %v1358
    %v1360 = vrot.slane %v1359, 1
    %v1361 = vadd.f32 %v1359, %v1360
    %v1362 = vsel %vm72, %v957, 0.0
    %v1363 = vrot.slane %v1362, 4
    %v1364 = vadd.f32 %v1362, %v1363
    %v1365 = vrot.slane %v1364, 2
    %v1366 = vadd.f32 %v1364, %v1365
    %v1367 = vrot.slane %v1366, 1
    %v1368 = vadd.f32 %v1366, %v1367
    %v1369 = vsel %vm72, %v958, 0.0
    %v1370 = vrot.slane %v1369, 4
    %v1371 = vadd.f32 %v1369, %v1370
    %v1372 = vrot.slane %v1371, 2
    %v1373 = vadd.f32 %v1371, %v1372
    %v1374 = vrot.slane %v1373, 1
    %v1375 = vadd.f32 %v1373, %v1374
    %v1376 = vsel %vm72, %v959, 0.0
    %v1377 = vrot.slane %v1376, 4
    %v1378 = vadd.f32 %v1376, %v1377
    %v1379 = vrot.slane %v1378, 2
    %v1380 = vadd.f32 %v1378, %v1379
    %v1381 = vrot.slane %v1380, 1
    %v1382 = vadd.f32 %v1380, %v1381
    %v1383 = vsel %vm72, %v960, 0.0
    %v1384 = vrot.slane %v1383, 4
    %v1385 = vadd.f32 %v1383, %v1384
    %v1386 = vrot.slane %v1385, 2
    %v1387 = vadd.f32 %v1385, %v1386
    %v1388 = vrot.slane %v1387, 1
    %v1389 = vadd.f32 %v1387, %v1388
    %v1390 = vsel %vm72, %v961, 0.0
    %v1391 = vrot.slane %v1390, 4
    %v1392 = vadd.f32 %v1390, %v1391
    %v1393 = vrot.slane %v1392, 2
    %v1394 = vadd.f32 %v1392, %v1393
    %v1395 = vrot.slane %v1394, 1
    %v1396 = vadd.f32 %v1394, %v1395
    %v1397 = vsel %vm72, %v962, 0.0
    %v1398 = vrot.slane %v1397, 4
    %v1399 = vadd.f32 %v1397, %v1398
    %v1400 = vrot.slane %v1399, 2
    %v1401 = vadd.f32 %v1399, %v1400
    %v1402 = vrot.slane %v1401, 1
    %v1403 = vadd.f32 %v1401, %v1402
    %v1404 = vsel %vm72, %v963, 0.0
    %v1405 = vrot.slane %v1404, 4
    %v1406 = vadd.f32 %v1404, %v1405
    %v1407 = vrot.slane %v1406, 2
    %v1408 = vadd.f32 %v1406, %v1407
    %v1409 = vrot.slane %v1408, 1
    %v1410 = vadd.f32 %v1408, %v1409
    %v1411 = vsel %vm72, %v964, 0.0
    %v1412 = vrot.slane %v1411, 4
    %v1413 = vadd.f32 %v1411, %v1412
    %v1414 = vrot.slane %v1413, 2
    %v1415 = vadd.f32 %v1413, %v1414
    %v1416 = vrot.slane %v1415, 1
    %v1417 = vadd.f32 %v1415, %v1416
    %v1418 = vsel %vm72, %v965, 0.0
    %v1419 = vrot.slane %v1418, 4
    %v1420 = vadd.f32 %v1418, %v1419
    %v1421 = vrot.slane %v1420, 2
    %v1422 = vadd.f32 %v1420, %v1421
    %v1423 = vrot.slane %v1422, 1
    %v1424 = vadd.f32 %v1422, %v1423
    %v1425 = vsel %vm72, %v966, 0.0
    %v1426 = vrot.slane %v1425, 4
    %v1427 = vadd.f32 %v1425, %v1426
    %v1428 = vrot.slane %v1427, 2
    %v1429 = vadd.f32 %v1427, %v1428
    %v1430 = vrot.slane %v1429, 1
    %v1431 = vadd.f32 %v1429, %v1430
    %v1432 = vpack.c.bf16 %v1214, %v1214
    %v1433 = vpack.c.bf16 %v1221, %v1221
    %v1434 = vpack.c.bf16 %v1228, %v1228
    %v1435 = vpack.c.bf16 %v1235, %v1235
    %v1436 = vpack.c.bf16 %v1242, %v1242
    %v1437 = vpack.c.bf16 %v1249, %v1249
    %v1438 = vpack.c.bf16 %v1256, %v1256
    %v1439 = vpack.c.bf16 %v1263, %v1263
    %v1440 = vpack.c.bf16 %v1270, %v1270
    %v1441 = vpack.c.bf16 %v1277, %v1277
    %v1442 = vpack.c.bf16 %v1284, %v1284
    %v1443 = vpack.c.bf16 %v1291, %v1291
    %v1444 = vpack.c.bf16 %v1298, %v1298
    %v1445 = vpack.c.bf16 %v1305, %v1305
    %v1446 = vpack.c.bf16 %v1312, %v1312
    %v1447 = vpack.c.bf16 %v1319, %v1319
    %v1448 = vpack.c.bf16 %v1326, %v1326
    %v1449 = vpack.c.bf16 %v1333, %v1333
    %v1450 = vpack.c.bf16 %v1340, %v1340
    %v1451 = vpack.c.bf16 %v1347, %v1347
    %v1452 = vpack.c.bf16 %v1354, %v1354
    %v1453 = vpack.c.bf16 %v1361, %v1361
    %v1454 = vpack.c.bf16 %v1368, %v1368
    %v1455 = vpack.c.bf16 %v1375, %v1375
    %v1456 = vpack.c.bf16 %v1382, %v1382
    %v1457 = vpack.c.bf16 %v1389, %v1389
    %v1458 = vpack.c.bf16 %v1396, %v1396
    %v1459 = vpack.c.bf16 %v1403, %v1403
    %v1460 = vpack.c.bf16 %v1410, %v1410
    %v1461 = vpack.c.bf16 %v1417, %v1417
    %v1462 = vpack.c.bf16 %v1424, %v1424
    %v1463 = vpack.c.bf16 %v1431, %v1431
    %s1464 = scalar_lea.vmem %s3, 16
    %v1465 = vld [vmem:[%s1464] sm:$0xf]
    %v1466 = vld [vmem:[%s1464 + $0x4] sm:$0xf]
    %v1467 = vld [vmem:[%s1464 + $0x8] sm:$0xf]
    %v1468 = vld [vmem:[%s1464 + $0xc] sm:$0xf]
    %v1501 = vunpack.c.l.b16 %v1432
    %v1502 = vunpack.c.l.b16 %v1433
    %v1503 = vunpack.c.l.b16 %v1434
    %v1504 = vunpack.c.l.b16 %v1435
    %v1505 = vunpack.c.l.b16 %v1436
    %v1506 = vunpack.c.l.b16 %v1437
    %v1507 = vunpack.c.l.b16 %v1438
    %v1508 = vunpack.c.l.b16 %v1439
    %v1509 = vunpack.c.l.b16 %v1440
    %v1510 = vunpack.c.l.b16 %v1441
    %v1511 = vunpack.c.l.b16 %v1442
    %v1512 = vunpack.c.l.b16 %v1443
    %v1513 = vunpack.c.l.b16 %v1444
    %v1514 = vunpack.c.l.b16 %v1445
    %v1515 = vunpack.c.l.b16 %v1446
    %v1516 = vunpack.c.l.b16 %v1447
    %v1517 = vunpack.c.l.b16 %v1448
    %v1518 = vunpack.c.l.b16 %v1449
    %v1519 = vunpack.c.l.b16 %v1450
    %v1520 = vunpack.c.l.b16 %v1451
    %v1521 = vunpack.c.l.b16 %v1452
    %v1522 = vunpack.c.l.b16 %v1453
    %v1523 = vunpack.c.l.b16 %v1454
    %v1524 = vunpack.c.l.b16 %v1455
    %v1525 = vunpack.c.l.b16 %v1456
    %v1526 = vunpack.c.l.b16 %v1457
    %v1527 = vunpack.c.l.b16 %v1458
    %v1528 = vunpack.c.l.b16 %v1459
    %v1529 = vunpack.c.l.b16 %v1460
    %v1530 = vunpack.c.l.b16 %v1461
    %v1531 = vunpack.c.l.b16 %v1462
    %v1532 = vunpack.c.l.b16 %v1463
    %vm1533 = vcmask 1041409
    %v1534 = vsel %vm1533, %v1502, %v1501
    %vm1535 = vcmask 1042434
    %v1536 = vsel %vm1535, %v1503, %v1534
    %vm1537 = vcmask 1043459
    %v1538 = vsel %vm1537, %v1504, %v1536
    %vm1539 = vcmask 1044484
    %v1540 = vsel %vm1539, %v1505, %v1538
    %vm1541 = vcmask 1045509
    %v1542 = vsel %vm1541, %v1506, %v1540
    %vm1543 = vcmask 1046534
    %v1544 = vsel %vm1543, %v1507, %v1542
    %vm1545 = vcmask 1047559
    %v1546 = vsel %vm1545, %v1508, %v1544
    %v1547 = vsel %vm1533, %v1510, %v1509
    %v1548 = vsel %vm1535, %v1511, %v1547
    %v1549 = vsel %vm1537, %v1512, %v1548
    %v1550 = vsel %vm1539, %v1513, %v1549
    %v1551 = vsel %vm1541, %v1514, %v1550
    %v1552 = vsel %vm1543, %v1515, %v1551
    %v1553 = vsel %vm1545, %v1516, %v1552
    %v1554 = vsel %vm1533, %v1518, %v1517
    %v1555 = vsel %vm1535, %v1519, %v1554
    %v1556 = vsel %vm1537, %v1520, %v1555
    %v1557 = vsel %vm1539, %v1521, %v1556
    %v1558 = vsel %vm1541, %v1522, %v1557
    %v1559 = vsel %vm1543, %v1523, %v1558
    %v1560 = vsel %vm1545, %v1524, %v1559
    %v1561 = vsel %vm1533, %v1526, %v1525
    %v1562 = vsel %vm1535, %v1527, %v1561
    %v1563 = vsel %vm1537, %v1528, %v1562
    %v1564 = vsel %vm1539, %v1529, %v1563
    %v1565 = vsel %vm1541, %v1530, %v1564
    %v1566 = vsel %vm1543, %v1531, %v1565
    %v1567 = vsel %vm1545, %v1532, %v1566
    %v1568 = vpack.c.b16 %v1553, %v1546
    %v1569 = vpack.c.b16 %v1567, %v1560
    %v1574 = vunpack.c.l.b16 %v1465
    %v1575 = vunpack.c.l.b16 %v1466
    %v1576 = vunpack.c.l.b16 %v1467
    %v1577 = vunpack.c.l.b16 %v1468
    %v1578 = vpack.c.b16 %v1575, %v1574
    %v1579 = vpack.c.b16 %v1577, %v1576
    %v1583 = vsel %vm72, %v1568, 0
    %v1586 = vsel %vm72, %v1569, 0
    %1588 = vmatprep.subr.bf16.mxu0 0
    %1589 = vmatpush1.bf16.msra.mxu0 %v1578
    %1590 = vmatprep.subr.bf16.mxu0 0
    %1591 = vmatpush1.bf16.msra.mxu0 %v1579
    %1592 = vmatprep.subr.bf16.mxu0 0
    %1593 = vmatpush1.bf16.msra.mxu0 0
    %1594 = vmatprep.subr.bf16.mxu0 0
    %1595 = vmatpush1.bf16.msra.mxu0 0
    %1596 = vmatprep.subr.bf16.mxu0 0
    %1597 = vmatpush1.bf16.msra.mxu0 0
    %1598 = vmatprep.subr.bf16.mxu0 0
    %1599 = vmatpush1.bf16.msra.mxu0 0
    %1600 = vmatprep.subr.bf16.mxu0 0
    %1601 = vmatpush1.bf16.msra.mxu0 0
    %1602 = vmatprep.subr.bf16.mxu0 0
    %1603 = vmatpush1.bf16.msra.mxu0 0
    %1604 = vmatprep.subr.bf16.mxu0 0
    %1605 = vmatpush1.bf16.msra.mxu0 0
    %1606 = vmatprep.subr.bf16.mxu0 0
    %1607 = vmatpush1.bf16.msra.mxu0 0
    %1608 = vmatprep.subr.bf16.mxu0 0
    %1609 = vmatpush1.bf16.msra.mxu0 0
    %1610 = vmatprep.subr.bf16.mxu0 0
    %1611 = vmatpush1.bf16.msra.mxu0 0
    %1612 = vmatprep.subr.bf16.mxu0 0
    %1613 = vmatpush1.bf16.msra.mxu0 0
    %1614 = vmatprep.subr.bf16.mxu0 0
    %1615 = vmatpush1.bf16.msra.mxu0 0
    %1616 = vmatprep.subr.bf16.mxu0 0
    %1617 = vmatpush1.bf16.msra.mxu0 0
    %1618 = vmatprep.subr.bf16.mxu0 0
    %1619 = vmatpush1.bf16.msra.mxu0 0
    %1620 = vmatprep.mubr.bf16.mxu0 0
    %1621 = vmatmul.mubr.bf16.gmra.mrb[0].mxu0 %v1583
    %v1622 = vpop.f32.mrb[0].mxu0
    %v1623 = vadd.f32 0.0, %v1622
    %v1624 = vpop.f32.mrb[0].mxu0
    %v1625 = vpop.f32.mrb[0].mxu0
    %v1626 = vadd.f32 0.0, %v1625
    %v1627 = vpop.f32.mrb[0].mxu0
    %1628 = vmatprep.mubr.bf16.mxu0 0
    %1629 = vmatmul.mubr.bf16.gmra.mrb[0].mxu0 %v1586
    %v1630 = vpop.f32.mrb[0].mxu0
    %v1631 = vadd.f32 0.0, %v1630
    %v1632 = vpop.f32.mrb[0].mxu0
    %v1633 = vpop.f32.mrb[0].mxu0
    %v1634 = vadd.f32 0.0, %v1633
    %v1635 = vpop.f32.mrb[0].mxu0
    %1636 = vdwg.mxu0
    %v1641 = vcombine.high %v1623, %v1623
    %v1643 = vunpack.c.l.s4 1966171168
    %v1644 = vunpack.c.0.s8 %v1643
    %v1645 = vlaneseq
    %v1646 = vshrl.u32 %v1645, 7
    %v1647 = vsub.s32 %v1644, %v1646
    %v1648 = vrot.slane %v1623, %v1647
    %v1650 = vunpack.c.l.s4 1966171168
    %v1651 = vunpack.c.0.s8 %v1650
    %v1652 = vlaneseq
    %v1653 = vshrl.u32 %v1652, 7
    %v1654 = vsub.s32 %v1651, %v1653
    %v1655 = vrot.slane %v1641, %v1654
    %v1656 = vcombine.high %v1648, %v1648
    %v1657 = vcombine.high %v1655, %v1655
    %v1659 = vunpack.c.l.s4 1966171168
    %v1660 = vunpack.c.0.s8 %v1659
    %v1661 = vlaneseq
    %v1662 = vshrl.u32 %v1661, 7
    %v1663 = vsub.s32 %v1660, %v1662
    %v1664 = vrot.slane %v1648, %v1663
    %v1666 = vunpack.c.l.s4 1966171168
    %v1667 = vunpack.c.0.s8 %v1666
    %v1668 = vlaneseq
    %v1669 = vshrl.u32 %v1668, 7
    %v1670 = vsub.s32 %v1667, %v1669
    %v1671 = vrot.slane %v1655, %v1670
    %v1673 = vunpack.c.l.s4 1966171168
    %v1674 = vunpack.c.0.s8 %v1673
    %v1675 = vlaneseq
    %v1676 = vshrl.u32 %v1675, 7
    %v1677 = vsub.s32 %v1674, %v1676
    %v1678 = vrot.slane %v1656, %v1677
    %v1680 = vunpack.c.l.s4 1966171168
    %v1681 = vunpack.c.0.s8 %v1680
    %v1682 = vlaneseq
    %v1683 = vshrl.u32 %v1682, 7
    %v1684 = vsub.s32 %v1681, %v1683
    %v1685 = vrot.slane %v1657, %v1684
    %v1686 = vcombine.high %v1664, %v1664
    %v1687 = vcombine.high %v1671, %v1671
    %v1688 = vcombine.high %v1678, %v1678
    %v1689 = vcombine.high %v1685, %v1685
    %v1690 = vcombine.high %v1626, %v1626
    %v1692 = vunpack.c.l.s4 1966171168
    %v1693 = vunpack.c.0.s8 %v1692
    %v1694 = vlaneseq
    %v1695 = vshrl.u32 %v1694, 7
    %v1696 = vsub.s32 %v1693, %v1695
    %v1697 = vrot.slane %v1626, %v1696
    %v1699 = vunpack.c.l.s4 1966171168
    %v1700 = vunpack.c.0.s8 %v1699
    %v1701 = vlaneseq
    %v1702 = vshrl.u32 %v1701, 7
    %v1703 = vsub.s32 %v1700, %v1702
    %v1704 = vrot.slane %v1690, %v1703
    %v1705 = vcombine.high %v1697, %v1697
    %v1706 = vcombine.high %v1704, %v1704
    %v1708 = vunpack.c.l.s4 1966171168
    %v1709 = vunpack.c.0.s8 %v1708
    %v1710 = vlaneseq
    %v1711 = vshrl.u32 %v1710, 7
    %v1712 = vsub.s32 %v1709, %v1711
    %v1713 = vrot.slane %v1697, %v1712
    %v1715 = vunpack.c.l.s4 1966171168
    %v1716 = vunpack.c.0.s8 %v1715
    %v1717 = vlaneseq
    %v1718 = vshrl.u32 %v1717, 7
    %v1719 = vsub.s32 %v1716, %v1718
    %v1720 = vrot.slane %v1704, %v1719
    %v1722 = vunpack.c.l.s4 1966171168
    %v1723 = vunpack.c.0.s8 %v1722
    %v1724 = vlaneseq
    %v1725 = vshrl.u32 %v1724, 7
    %v1726 = vsub.s32 %v1723, %v1725
    %v1727 = vrot.slane %v1705, %v1726
    %v1729 = vunpack.c.l.s4 1966171168
    %v1730 = vunpack.c.0.s8 %v1729
    %v1731 = vlaneseq
    %v1732 = vshrl.u32 %v1731, 7
    %v1733 = vsub.s32 %v1730, %v1732
    %v1734 = vrot.slane %v1706, %v1733
    %v1735 = vcombine.high %v1713, %v1713
    %v1736 = vcombine.high %v1720, %v1720
    %v1737 = vcombine.high %v1727, %v1727
    %v1738 = vcombine.high %v1734, %v1734
    %v1739 = vcombine.high %v1631, %v1631
    %v1741 = vunpack.c.l.s4 1966171168
    %v1742 = vunpack.c.0.s8 %v1741
    %v1743 = vlaneseq
    %v1744 = vshrl.u32 %v1743, 7
    %v1745 = vsub.s32 %v1742, %v1744
    %v1746 = vrot.slane %v1631, %v1745
    %v1748 = vunpack.c.l.s4 1966171168
    %v1749 = vunpack.c.0.s8 %v1748
    %v1750 = vlaneseq
    %v1751 = vshrl.u32 %v1750, 7
    %v1752 = vsub.s32 %v1749, %v1751
    %v1753 = vrot.slane %v1739, %v1752
    %v1754 = vcombine.high %v1746, %v1746
    %v1755 = vcombine.high %v1753, %v1753
    %v1757 = vunpack.c.l.s4 1966171168
    %v1758 = vunpack.c.0.s8 %v1757
    %v1759 = vlaneseq
    %v1760 = vshrl.u32 %v1759, 7
    %v1761 = vsub.s32 %v1758, %v1760
    %v1762 = vrot.slane %v1746, %v1761
    %v1764 = vunpack.c.l.s4 1966171168
    %v1765 = vunpack.c.0.s8 %v1764
    %v1766 = vlaneseq
    %v1767 = vshrl.u32 %v1766, 7
    %v1768 = vsub.s32 %v1765, %v1767
    %v1769 = vrot.slane %v1753, %v1768
    %v1771 = vunpack.c.l.s4 1966171168
    %v1772 = vunpack.c.0.s8 %v1771
    %v1773 = vlaneseq
    %v1774 = vshrl.u32 %v1773, 7
    %v1775 = vsub.s32 %v1772, %v1774
    %v1776 = vrot.slane %v1754, %v1775
    %v1778 = vunpack.c.l.s4 1966171168
    %v1779 = vunpack.c.0.s8 %v1778
    %v1780 = vlaneseq
    %v1781 = vshrl.u32 %v1780, 7
    %v1782 = vsub.s32 %v1779, %v1781
    %v1783 = vrot.slane %v1755, %v1782
    %v1784 = vcombine.high %v1762, %v1762
    %v1785 = vcombine.high %v1769, %v1769
    %v1786 = vcombine.high %v1776, %v1776
    %v1787 = vcombine.high %v1783, %v1783
    %v1788 = vcombine.high %v1634, %v1634
    %v1790 = vunpack.c.l.s4 1966171168
    %v1791 = vunpack.c.0.s8 %v1790
    %v1792 = vlaneseq
    %v1793 = vshrl.u32 %v1792, 7
    %v1794 = vsub.s32 %v1791, %v1793
    %v1795 = vrot.slane %v1634, %v1794
    %v1797 = vunpack.c.l.s4 1966171168
    %v1798 = vunpack.c.0.s8 %v1797
    %v1799 = vlaneseq
    %v1800 = vshrl.u32 %v1799, 7
    %v1801 = vsub.s32 %v1798, %v1800
    %v1802 = vrot.slane %v1788, %v1801
    %v1803 = vcombine.high %v1795, %v1795
    %v1804 = vcombine.high %v1802, %v1802
    %v1806 = vunpack.c.l.s4 1966171168
    %v1807 = vunpack.c.0.s8 %v1806
    %v1808 = vlaneseq
    %v1809 = vshrl.u32 %v1808, 7
    %v1810 = vsub.s32 %v1807, %v1809
    %v1811 = vrot.slane %v1795, %v1810
    %v1813 = vunpack.c.l.s4 1966171168
    %v1814 = vunpack.c.0.s8 %v1813
    %v1815 = vlaneseq
    %v1816 = vshrl.u32 %v1815, 7
    %v1817 = vsub.s32 %v1814, %v1816
    %v1818 = vrot.slane %v1802, %v1817
    %v1820 = vunpack.c.l.s4 1966171168
    %v1821 = vunpack.c.0.s8 %v1820
    %v1822 = vlaneseq
    %v1823 = vshrl.u32 %v1822, 7
    %v1824 = vsub.s32 %v1821, %v1823
    %v1825 = vrot.slane %v1803, %v1824
    %v1827 = vunpack.c.l.s4 1966171168
    %v1828 = vunpack.c.0.s8 %v1827
    %v1829 = vlaneseq
    %v1830 = vshrl.u32 %v1829, 7
    %v1831 = vsub.s32 %v1828, %v1830
    %v1832 = vrot.slane %v1804, %v1831
    %v1833 = vcombine.high %v1811, %v1811
    %v1834 = vcombine.high %v1818, %v1818
    %v1835 = vcombine.high %v1825, %v1825
    %v1836 = vcombine.high %v1832, %v1832
    %v1837 = vlaneseq
    %v1838 = vshrl.u32 %v1837, 7
    %v1839 = vsub.s32 0, %v1838
    %v1840 = vrot.slane %v1664, %v1839
    %v1841 = vlaneseq
    %v1842 = vshrl.u32 %v1841, 7
    %v1843 = vsub.s32 0, %v1842
    %v1844 = vrot.slane %v1678, %v1843
    %v1845 = vlaneseq
    %v1846 = vshrl.u32 %v1845, 7
    %v1847 = vsub.s32 0, %v1846
    %v1848 = vrot.slane %v1686, %v1847
    %v1849 = vlaneseq
    %v1850 = vshrl.u32 %v1849, 7
    %v1851 = vsub.s32 0, %v1850
    %v1852 = vrot.slane %v1688, %v1851
    %v1853 = vlaneseq
    %v1854 = vshrl.u32 %v1853, 7
    %v1855 = vsub.s32 0, %v1854
    %v1856 = vrot.slane %v1671, %v1855
    %v1857 = vlaneseq
    %v1858 = vshrl.u32 %v1857, 7
    %v1859 = vsub.s32 0, %v1858
    %v1860 = vrot.slane %v1685, %v1859
    %v1861 = vlaneseq
    %v1862 = vshrl.u32 %v1861, 7
    %v1863 = vsub.s32 0, %v1862
    %v1864 = vrot.slane %v1687, %v1863
    %v1865 = vlaneseq
    %v1866 = vshrl.u32 %v1865, 7
    %v1867 = vsub.s32 0, %v1866
    %v1868 = vrot.slane %v1689, %v1867
    %v1869 = vlaneseq
    %v1870 = vshrl.u32 %v1869, 7
    %v1871 = vsub.s32 0, %v1870
    %v1872 = vrot.slane %v1713, %v1871
    %v1873 = vlaneseq
    %v1874 = vshrl.u32 %v1873, 7
    %v1875 = vsub.s32 0, %v1874
    %v1876 = vrot.slane %v1727, %v1875
    %v1877 = vlaneseq
    %v1878 = vshrl.u32 %v1877, 7
    %v1879 = vsub.s32 0, %v1878
    %v1880 = vrot.slane %v1735, %v1879
    %v1881 = vlaneseq
    %v1882 = vshrl.u32 %v1881, 7
    %v1883 = vsub.s32 0, %v1882
    %v1884 = vrot.slane %v1737, %v1883
    %v1885 = vlaneseq
    %v1886 = vshrl.u32 %v1885, 7
    %v1887 = vsub.s32 0, %v1886
    %v1888 = vrot.slane %v1720, %v1887
    %v1889 = vlaneseq
    %v1890 = vshrl.u32 %v1889, 7
    %v1891 = vsub.s32 0, %v1890
    %v1892 = vrot.slane %v1734, %v1891
    %v1893 = vlaneseq
    %v1894 = vshrl.u32 %v1893, 7
    %v1895 = vsub.s32 0, %v1894
    %v1896 = vrot.slane %v1736, %v1895
    %v1897 = vlaneseq
    %v1898 = vshrl.u32 %v1897, 7
    %v1899 = vsub.s32 0, %v1898
    %v1900 = vrot.slane %v1738, %v1899
    %v1901 = vlaneseq
    %v1902 = vshrl.u32 %v1901, 7
    %v1903 = vsub.s32 0, %v1902
    %v1904 = vrot.slane %v1762, %v1903
    %v1905 = vlaneseq
    %v1906 = vshrl.u32 %v1905, 7
    %v1907 = vsub.s32 0, %v1906
    %v1908 = vrot.slane %v1776, %v1907
    %v1909 = vlaneseq
    %v1910 = vshrl.u32 %v1909, 7
    %v1911 = vsub.s32 0, %v1910
    %v1912 = vrot.slane %v1784, %v1911
    %v1913 = vlaneseq
    %v1914 = vshrl.u32 %v1913, 7
    %v1915 = vsub.s32 0, %v1914
    %v1916 = vrot.slane %v1786, %v1915
    %v1917 = vlaneseq
    %v1918 = vshrl.u32 %v1917, 7
    %v1919 = vsub.s32 0, %v1918
    %v1920 = vrot.slane %v1769, %v1919
    %v1921 = vlaneseq
    %v1922 = vshrl.u32 %v1921, 7
    %v1923 = vsub.s32 0, %v1922
    %v1924 = vrot.slane %v1783, %v1923
    %v1925 = vlaneseq
    %v1926 = vshrl.u32 %v1925, 7
    %v1927 = vsub.s32 0, %v1926
    %v1928 = vrot.slane %v1785, %v1927
    %v1929 = vlaneseq
    %v1930 = vshrl.u32 %v1929, 7
    %v1931 = vsub.s32 0, %v1930
    %v1932 = vrot.slane %v1787, %v1931
    %v1933 = vlaneseq
    %v1934 = vshrl.u32 %v1933, 7
    %v1935 = vsub.s32 0, %v1934
    %v1936 = vrot.slane %v1811, %v1935
    %v1937 = vlaneseq
    %v1938 = vshrl.u32 %v1937, 7
    %v1939 = vsub.s32 0, %v1938
    %v1940 = vrot.slane %v1825, %v1939
    %v1941 = vlaneseq
    %v1942 = vshrl.u32 %v1941, 7
    %v1943 = vsub.s32 0, %v1942
    %v1944 = vrot.slane %v1833, %v1943
    %v1945 = vlaneseq
    %v1946 = vshrl.u32 %v1945, 7
    %v1947 = vsub.s32 0, %v1946
    %v1948 = vrot.slane %v1835, %v1947
    %v1949 = vlaneseq
    %v1950 = vshrl.u32 %v1949, 7
    %v1951 = vsub.s32 0, %v1950
    %v1952 = vrot.slane %v1818, %v1951
    %v1953 = vlaneseq
    %v1954 = vshrl.u32 %v1953, 7
    %v1955 = vsub.s32 0, %v1954
    %v1956 = vrot.slane %v1832, %v1955
    %v1957 = vlaneseq
    %v1958 = vshrl.u32 %v1957, 7
    %v1959 = vsub.s32 0, %v1958
    %v1960 = vrot.slane %v1834, %v1959
    %v1961 = vlaneseq
    %v1962 = vshrl.u32 %v1961, 7
    %v1963 = vsub.s32 0, %v1962
    %v1964 = vrot.slane %v1836, %v1963
    %v1997 = vadd.f32 %v1082, %v1840
    %v1998 = vadd.f32 %v1085, %v1844
    %v1999 = vadd.f32 %v1090, %v1848
    %v2000 = vadd.f32 %v1093, %v1852
    %v2001 = vadd.f32 %v1098, %v1856
    %v2002 = vadd.f32 %v1101, %v1860
    %v2003 = vadd.f32 %v1106, %v1864
    %v2004 = vadd.f32 %v1109, %v1868
    %v2005 = vadd.f32 %v1114, %v1872
    %v2006 = vadd.f32 %v1117, %v1876
    %v2007 = vadd.f32 %v1122, %v1880
    %v2008 = vadd.f32 %v1125, %v1884
    %v2009 = vadd.f32 %v1130, %v1888
    %v2010 = vadd.f32 %v1133, %v1892
    %v2011 = vadd.f32 %v1138, %v1896
    %v2012 = vadd.f32 %v1141, %v1900
    %v2013 = vadd.f32 %v1146, %v1904
    %v2014 = vadd.f32 %v1149, %v1908
    %v2015 = vadd.f32 %v1154, %v1912
    %v2016 = vadd.f32 %v1157, %v1916
    %v2017 = vadd.f32 %v1162, %v1920
    %v2018 = vadd.f32 %v1165, %v1924
    %v2019 = vadd.f32 %v1170, %v1928
    %v2020 = vadd.f32 %v1173, %v1932
    %v2021 = vadd.f32 %v1178, %v1936
    %v2022 = vadd.f32 %v1181, %v1940
    %v2023 = vadd.f32 %v1186, %v1944
    %v2024 = vadd.f32 %v1189, %v1948
    %v2025 = vadd.f32 %v1194, %v1952
    %v2026 = vadd.f32 %v1197, %v1956
    %v2027 = vadd.f32 %v1202, %v1960
    %v2028 = vadd.f32 %v1205, %v1964
    %v2029 = vlaneseq
    %v2030 = vshrl.u32 %v2029, 7
    %v2031 = vsub.s32 1, %v2030
    %v2032 = vrot.slane %v71, %v2031
    %v2033 = vadd.f32 %v1997, %v2032
    %v2034 = vadd.f32 %v1998, %v2032
    %v2035 = vadd.f32 %v1999, %v2032
    %v2036 = vadd.f32 %v2000, %v2032
    %v2037 = vadd.f32 %v2001, %v2032
    %v2038 = vadd.f32 %v2002, %v2032
    %v2039 = vadd.f32 %v2003, %v2032
    %v2040 = vadd.f32 %v2004, %v2032
    %v2041 = vadd.f32 %v2005, %v2032
    %v2042 = vadd.f32 %v2006, %v2032
    %v2043 = vadd.f32 %v2007, %v2032
    %v2044 = vadd.f32 %v2008, %v2032
    %v2045 = vadd.f32 %v2009, %v2032
    %v2046 = vadd.f32 %v2010, %v2032
    %v2047 = vadd.f32 %v2011, %v2032
    %v2048 = vadd.f32 %v2012, %v2032
    %v2049 = vadd.f32 %v2013, %v2032
    %v2050 = vadd.f32 %v2014, %v2032
    %v2051 = vadd.f32 %v2015, %v2032
    %v2052 = vadd.f32 %v2016, %v2032
    %v2053 = vadd.f32 %v2017, %v2032
    %v2054 = vadd.f32 %v2018, %v2032
    %v2055 = vadd.f32 %v2019, %v2032
    %v2056 = vadd.f32 %v2020, %v2032
    %v2057 = vadd.f32 %v2021, %v2032
    %v2058 = vadd.f32 %v2022, %v2032
    %v2059 = vadd.f32 %v2023, %v2032
    %v2060 = vadd.f32 %v2024, %v2032
    %v2061 = vadd.f32 %v2025, %v2032
    %v2062 = vadd.f32 %v2026, %v2032
    %v2063 = vadd.f32 %v2027, %v2032
    %v2064 = vadd.f32 %v2028, %v2032
    %v2065 = vmul.f32 %v2033, 0.5
    %v2066 = vmul.f32 %v2034, 0.5
    %v2067 = vmul.f32 %v2035, 0.5
    %v2068 = vmul.f32 %v2036, 0.5
    %v2069 = vmul.f32 %v2037, 0.5
    %v2070 = vmul.f32 %v2038, 0.5
    %v2071 = vmul.f32 %v2039, 0.5
    %v2072 = vmul.f32 %v2040, 0.5
    %v2073 = vmul.f32 %v2041, 0.5
    %v2074 = vmul.f32 %v2042, 0.5
    %v2075 = vmul.f32 %v2043, 0.5
    %v2076 = vmul.f32 %v2044, 0.5
    %v2077 = vmul.f32 %v2045, 0.5
    %v2078 = vmul.f32 %v2046, 0.5
    %v2079 = vmul.f32 %v2047, 0.5
    %v2080 = vmul.f32 %v2048, 0.5
    %v2081 = vmul.f32 %v2049, 0.5
    %v2082 = vmul.f32 %v2050, 0.5
    %v2083 = vmul.f32 %v2051, 0.5
    %v2084 = vmul.f32 %v2052, 0.5
    %v2085 = vmul.f32 %v2053, 0.5
    %v2086 = vmul.f32 %v2054, 0.5
    %v2087 = vmul.f32 %v2055, 0.5
    %v2088 = vmul.f32 %v2056, 0.5
    %v2089 = vmul.f32 %v2057, 0.5
    %v2090 = vmul.f32 %v2058, 0.5
    %v2091 = vmul.f32 %v2059, 0.5
    %v2092 = vmul.f32 %v2060, 0.5
    %v2093 = vmul.f32 %v2061, 0.5
    %v2094 = vmul.f32 %v2062, 0.5
    %v2095 = vmul.f32 %v2063, 0.5
    %v2096 = vmul.f32 %v2064, 0.5
    %v2097 = vmul.f32 %v2033, 0.70710677
    %v2098 = vmul.f32 %v2034, 0.70710677
    %v2099 = vmul.f32 %v2035, 0.70710677
    %v2100 = vmul.f32 %v2036, 0.70710677
    %v2101 = vmul.f32 %v2037, 0.70710677
    %v2102 = vmul.f32 %v2038, 0.70710677
    %v2103 = vmul.f32 %v2039, 0.70710677
    %v2104 = vmul.f32 %v2040, 0.70710677
    %v2105 = vmul.f32 %v2041, 0.70710677
    %v2106 = vmul.f32 %v2042, 0.70710677
    %v2107 = vmul.f32 %v2043, 0.70710677
    %v2108 = vmul.f32 %v2044, 0.70710677
    %v2109 = vmul.f32 %v2045, 0.70710677
    %v2110 = vmul.f32 %v2046, 0.70710677
    %v2111 = vmul.f32 %v2047, 0.70710677
    %v2112 = vmul.f32 %v2048, 0.70710677
    %v2113 = vmul.f32 %v2049, 0.70710677
    %v2114 = vmul.f32 %v2050, 0.70710677
    %v2115 = vmul.f32 %v2051, 0.70710677
    %v2116 = vmul.f32 %v2052, 0.70710677
    %v2117 = vmul.f32 %v2053, 0.70710677
    %v2118 = vmul.f32 %v2054, 0.70710677
    %v2119 = vmul.f32 %v2055, 0.70710677
    %v2120 = vmul.f32 %v2056, 0.70710677
    %v2121 = vmul.f32 %v2057, 0.70710677
    %v2122 = vmul.f32 %v2058, 0.70710677
    %v2123 = vmul.f32 %v2059, 0.70710677
    %v2124 = vmul.f32 %v2060, 0.70710677
    %v2125 = vmul.f32 %v2061, 0.70710677
    %v2126 = vmul.f32 %v2062, 0.70710677
    %v2127 = vmul.f32 %v2063, 0.70710677
    %v2128 = vmul.f32 %v2064, 0.70710677
    %v2129 = verf.f32.pop %v2097
    %v2130 = verf.f32.pop %v2098
    %v2131 = verf.f32.pop %v2099
    %v2132 = verf.f32.pop %v2100
    %v2133 = verf.f32.pop %v2101
    %v2134 = verf.f32.pop %v2102
    %v2135 = verf.f32.pop %v2103
    %v2136 = verf.f32.pop %v2104
    %v2137 = verf.f32.pop %v2105
    %v2138 = verf.f32.pop %v2106
    %v2139 = verf.f32.pop %v2107
    %v2140 = verf.f32.pop %v2108
    %v2141 = verf.f32.pop %v2109
    %v2142 = verf.f32.pop %v2110
    %v2143 = verf.f32.pop %v2111
    %v2144 = verf.f32.pop %v2112
    %v2145 = verf.f32.pop %v2113
    %v2146 = verf.f32.pop %v2114
    %v2147 = verf.f32.pop %v2115
    %v2148 = verf.f32.pop %v2116
    %v2149 = verf.f32.pop %v2117
    %v2150 = verf.f32.pop %v2118
    %v2151 = verf.f32.pop %v2119
    %v2152 = verf.f32.pop %v2120
    %v2153 = verf.f32.pop %v2121
    %v2154 = verf.f32.pop %v2122
    %v2155 = verf.f32.pop %v2123
    %v2156 = verf.f32.pop %v2124
    %v2157 = verf.f32.pop %v2125
    %v2158 = verf.f32.pop %v2126
    %v2159 = verf.f32.pop %v2127
    %v2160 = verf.f32.pop %v2128
    %v2161 = vadd.f32 %v2129, 1.0
    %v2162 = vadd.f32 %v2130, 1.0
    %v2163 = vadd.f32 %v2131, 1.0
    %v2164 = vadd.f32 %v2132, 1.0
    %v2165 = vadd.f32 %v2133, 1.0
    %v2166 = vadd.f32 %v2134, 1.0
    %v2167 = vadd.f32 %v2135, 1.0
    %v2168 = vadd.f32 %v2136, 1.0
    %v2169 = vadd.f32 %v2137, 1.0
    %v2170 = vadd.f32 %v2138, 1.0
    %v2171 = vadd.f32 %v2139, 1.0
    %v2172 = vadd.f32 %v2140, 1.0
    %v2173 = vadd.f32 %v2141, 1.0
    %v2174 = vadd.f32 %v2142, 1.0
    %v2175 = vadd.f32 %v2143, 1.0
    %v2176 = vadd.f32 %v2144, 1.0
    %v2177 = vadd.f32 %v2145, 1.0
    %v2178 = vadd.f32 %v2146, 1.0
    %v2179 = vadd.f32 %v2147, 1.0
    %v2180 = vadd.f32 %v2148, 1.0
    %v2181 = vadd.f32 %v2149, 1.0
    %v2182 = vadd.f32 %v2150, 1.0
    %v2183 = vadd.f32 %v2151, 1.0
    %v2184 = vadd.f32 %v2152, 1.0
    %v2185 = vadd.f32 %v2153, 1.0
    %v2186 = vadd.f32 %v2154, 1.0
    %v2187 = vadd.f32 %v2155, 1.0
    %v2188 = vadd.f32 %v2156, 1.0
    %v2189 = vadd.f32 %v2157, 1.0
    %v2190 = vadd.f32 %v2158, 1.0
    %v2191 = vadd.f32 %v2159, 1.0
    %v2192 = vadd.f32 %v2160, 1.0
    %v2193 = vmul.f32 %v2065, %v2161
    %v2194 = vmul.f32 %v2066, %v2162
    %v2195 = vmul.f32 %v2067, %v2163
    %v2196 = vmul.f32 %v2068, %v2164
    %v2197 = vmul.f32 %v2069, %v2165
    %v2198 = vmul.f32 %v2070, %v2166
    %v2199 = vmul.f32 %v2071, %v2167
    %v2200 = vmul.f32 %v2072, %v2168
    %v2201 = vmul.f32 %v2073, %v2169
    %v2202 = vmul.f32 %v2074, %v2170
    %v2203 = vmul.f32 %v2075, %v2171
    %v2204 = vmul.f32 %v2076, %v2172
    %v2205 = vmul.f32 %v2077, %v2173
    %v2206 = vmul.f32 %v2078, %v2174
    %v2207 = vmul.f32 %v2079, %v2175
    %v2208 = vmul.f32 %v2080, %v2176
    %v2209 = vmul.f32 %v2081, %v2177
    %v2210 = vmul.f32 %v2082, %v2178
    %v2211 = vmul.f32 %v2083, %v2179
    %v2212 = vmul.f32 %v2084, %v2180
    %v2213 = vmul.f32 %v2085, %v2181
    %v2214 = vmul.f32 %v2086, %v2182
    %v2215 = vmul.f32 %v2087, %v2183
    %v2216 = vmul.f32 %v2088, %v2184
    %v2217 = vmul.f32 %v2089, %v2185
    %v2218 = vmul.f32 %v2090, %v2186
    %v2219 = vmul.f32 %v2091, %v2187
    %v2220 = vmul.f32 %v2092, %v2188
    %v2221 = vmul.f32 %v2093, %v2189
    %v2222 = vmul.f32 %v2094, %v2190
    %v2223 = vmul.f32 %v2095, %v2191
    %v2224 = vmul.f32 %v2096, %v2192
    %v2225 = vpack.c.bf16 %v2194, %v2193
    %v2226 = vpack.c.bf16 %v2196, %v2195
    %v2227 = vpack.c.bf16 %v2198, %v2197
    %v2228 = vpack.c.bf16 %v2200, %v2199
    %v2229 = vpack.c.bf16 %v2202, %v2201
    %v2230 = vpack.c.bf16 %v2204, %v2203
    %v2231 = vpack.c.bf16 %v2206, %v2205
    %v2232 = vpack.c.bf16 %v2208, %v2207
    %v2233 = vpack.c.bf16 %v2210, %v2209
    %v2234 = vpack.c.bf16 %v2212, %v2211
    %v2235 = vpack.c.bf16 %v2214, %v2213
    %v2236 = vpack.c.bf16 %v2216, %v2215
    %v2237 = vpack.c.bf16 %v2218, %v2217
    %v2238 = vpack.c.bf16 %v2220, %v2219
    %v2239 = vpack.c.bf16 %v2222, %v2221
    %v2240 = vpack.c.bf16 %v2224, %v2223
    %v2241 = vld [vmem:[%s4] sm:$0xf]
    %v2242 = vld [vmem:[%s4 + $0x4] sm:$0xf]
    %v2243 = vlaneseq
    %v2244 = vshrl.u32 %v2243, 7
    %v2245 = vsub.s32 2, %v2244
    %v2246 = vrot.slane %v71, %v2245
    %v2249 = vunpack.c.l.b16 %v2241
    %v2250 = vunpack.c.l.b16 %v2242
    %v2251 = vpack.c.b16 %v2250, %v2249
    %vm2253 = vcmask 130048
    %v2255 = vsel %vm2253, %v2225, 0
    %v2258 = vsel %vm2253, %v2226, 0
    %v2261 = vsel %vm2253, %v2227, 0
    %v2264 = vsel %vm2253, %v2228, 0
    %v2267 = vsel %vm2253, %v2229, 0
    %v2270 = vsel %vm2253, %v2230, 0
    %v2273 = vsel %vm2253, %v2231, 0
    %v2276 = vsel %vm2253, %v2232, 0
    %v2279 = vsel %vm2253, %v2233, 0
    %v2282 = vsel %vm2253, %v2234, 0
    %v2285 = vsel %vm2253, %v2235, 0
    %v2288 = vsel %vm2253, %v2236, 0
    %v2291 = vsel %vm2253, %v2237, 0
    %v2294 = vsel %vm2253, %v2238, 0
    %v2297 = vsel %vm2253, %v2239, 0
    %v2300 = vsel %vm2253, %v2240, 0
    %2302 = vmatprep.subr.bf16.mxu0 0
    %2303 = vmatpush1.bf16.msra.mxu0 %v2251
    %2304 = vmatprep.subr.bf16.mxu0 0
    %2305 = vmatpush1.bf16.msra.mxu0 0
    %2306 = vmatprep.subr.bf16.mxu0 0
    %2307 = vmatpush1.bf16.msra.mxu0 0
    %2308 = vmatprep.subr.bf16.mxu0 0
    %2309 = vmatpush1.bf16.msra.mxu0 0
    %2310 = vmatprep.subr.bf16.mxu0 0
    %2311 = vmatpush1.bf16.msra.mxu0 0
    %2312 = vmatprep.subr.bf16.mxu0 0
    %2313 = vmatpush1.bf16.msra.mxu0 0
    %2314 = vmatprep.subr.bf16.mxu0 0
    %2315 = vmatpush1.bf16.msra.mxu0 0
    %2316 = vmatprep.subr.bf16.mxu0 0
    %2317 = vmatpush1.bf16.msra.mxu0 0
    %2318 = vmatprep.subr.bf16.mxu0 0
    %2319 = vmatpush1.bf16.msra.mxu0 0
    %2320 = vmatprep.subr.bf16.mxu0 0
    %2321 = vmatpush1.bf16.msra.mxu0 0
    %2322 = vmatprep.subr.bf16.mxu0 0
    %2323 = vmatpush1.bf16.msra.mxu0 0
    %2324 = vmatprep.subr.bf16.mxu0 0
    %2325 = vmatpush1.bf16.msra.mxu0 0
    %2326 = vmatprep.subr.bf16.mxu0 0
    %2327 = vmatpush1.bf16.msra.mxu0 0
    %2328 = vmatprep.subr.bf16.mxu0 0
    %2329 = vmatpush1.bf16.msra.mxu0 0
    %2330 = vmatprep.subr.bf16.mxu0 0
    %2331 = vmatpush1.bf16.msra.mxu0 0
    %2332 = vmatprep.subr.bf16.mxu0 0
    %2333 = vmatpush1.bf16.msra.mxu0 0
    %2334 = vmatprep.mubr.bf16.mxu0 0
    %2335 = vmatmul.mubr.bf16.gmra.mrb[0].mxu0 %v2255
    %v2336 = vpop.f32.mrb[0].mxu0
    %v2337 = vadd.f32 %v2246, %v2336
    %v2338 = vpop.f32.mrb[0].mxu0
    %v2339 = vpop.f32.mrb[0].mxu0
    %v2340 = vadd.f32 %v2246, %v2339
    %v2341 = vpop.f32.mrb[0].mxu0
    %2342 = vmatprep.mubr.bf16.mxu0 0
    %2343 = vmatmul.mubr.bf16.gmra.mrb[0].mxu0 %v2258
    %v2344 = vpop.f32.mrb[0].mxu0
    %v2345 = vadd.f32 %v2246, %v2344
    %v2346 = vpop.f32.mrb[0].mxu0
    %v2347 = vpop.f32.mrb[0].mxu0
    %v2348 = vadd.f32 %v2246, %v2347
    %v2349 = vpop.f32.mrb[0].mxu0
    %2350 = vmatprep.mubr.bf16.mxu0 0
    %2351 = vmatmul.mubr.bf16.gmra.mrb[0].mxu0 %v2261
    %v2352 = vpop.f32.mrb[0].mxu0
    %v2353 = vadd.f32 %v2246, %v2352
    %v2354 = vpop.f32.mrb[0].mxu0
    %v2355 = vpop.f32.mrb[0].mxu0
    %v2356 = vadd.f32 %v2246, %v2355
    %v2357 = vpop.f32.mrb[0].mxu0
    %2358 = vmatprep.mubr.bf16.mxu0 0
    %2359 = vmatmul.mubr.bf16.gmra.mrb[0].mxu0 %v2264
    %v2360 = vpop.f32.mrb[0].mxu0
    %v2361 = vadd.f32 %v2246, %v2360
    %v2362 = vpop.f32.mrb[0].mxu0
    %v2363 = vpop.f32.mrb[0].mxu0
    %v2364 = vadd.f32 %v2246, %v2363
    %v2365 = vpop.f32.mrb[0].mxu0
    %2366 = vmatprep.mubr.bf16.mxu0 0
    %2367 = vmatmul.mubr.bf16.gmra.mrb[0].mxu0 %v2267
    %v2368 = vpop.f32.mrb[0].mxu0
    %v2369 = vadd.f32 %v2246, %v2368
    %v2370 = vpop.f32.mrb[0].mxu0
    %v2371 = vpop.f32.mrb[0].mxu0
    %v2372 = vadd.f32 %v2246, %v2371
    %v2373 = vpop.f32.mrb[0].mxu0
    %2374 = vmatprep.mubr.bf16.mxu0 0
    %2375 = vmatmul.mubr.bf16.gmra.mrb[0].mxu0 %v2270
    %v2376 = vpop.f32.mrb[0].mxu0
    %v2377 = vadd.f32 %v2246, %v2376
    %v2378 = vpop.f32.mrb[0].mxu0
    %v2379 = vpop.f32.mrb[0].mxu0
    %v2380 = vadd.f32 %v2246, %v2379
    %v2381 = vpop.f32.mrb[0].mxu0
    %2382 = vmatprep.mubr.bf16.mxu0 0
    %2383 = vmatmul.mubr.bf16.gmra.mrb[0].mxu0 %v2273
    %v2384 = vpop.f32.mrb[0].mxu0
    %v2385 = vadd.f32 %v2246, %v2384
    %v2386 = vpop.f32.mrb[0].mxu0
    %v2387 = vpop.f32.mrb[0].mxu0
    %v2388 = vadd.f32 %v2246, %v2387
    %v2389 = vpop.f32.mrb[0].mxu0
    %2390 = vmatprep.mubr.bf16.mxu0 0
    %2391 = vmatmul.mubr.bf16.gmra.mrb[0].mxu0 %v2276
    %v2392 = vpop.f32.mrb[0].mxu0
    %v2393 = vadd.f32 %v2246, %v2392
    %v2394 = vpop.f32.mrb[0].mxu0
    %v2395 = vpop.f32.mrb[0].mxu0
    %v2396 = vadd.f32 %v2246, %v2395
    %v2397 = vpop.f32.mrb[0].mxu0
    %2398 = vmatprep.mubr.bf16.mxu0 0
    %2399 = vmatmul.mubr.bf16.gmra.mrb[0].mxu0 %v2279
    %v2400 = vpop.f32.mrb[0].mxu0
    %v2401 = vadd.f32 %v2246, %v2400
    %v2402 = vpop.f32.mrb[0].mxu0
    %v2403 = vpop.f32.mrb[0].mxu0
    %v2404 = vadd.f32 %v2246, %v2403
    %v2405 = vpop.f32.mrb[0].mxu0
    %2406 = vmatprep.mubr.bf16.mxu0 0
    %2407 = vmatmul.mubr.bf16.gmra.mrb[0].mxu0 %v2282
    %v2408 = vpop.f32.mrb[0].mxu0
    %v2409 = vadd.f32 %v2246, %v2408
    %v2410 = vpop.f32.mrb[0].mxu0
    %v2411 = vpop.f32.mrb[0].mxu0
    %v2412 = vadd.f32 %v2246, %v2411
    %v2413 = vpop.f32.mrb[0].mxu0
    %2414 = vmatprep.mubr.bf16.mxu0 0
    %2415 = vmatmul.mubr.bf16.gmra.mrb[0].mxu0 %v2285
    %v2416 = vpop.f32.mrb[0].mxu0
    %v2417 = vadd.f32 %v2246, %v2416
    %v2418 = vpop.f32.mrb[0].mxu0
    %v2419 = vpop.f32.mrb[0].mxu0
    %v2420 = vadd.f32 %v2246, %v2419
    %v2421 = vpop.f32.mrb[0].mxu0
    %2422 = vmatprep.mubr.bf16.mxu0 0
    %2423 = vmatmul.mubr.bf16.gmra.mrb[0].mxu0 %v2288
    %v2424 = vpop.f32.mrb[0].mxu0
    %v2425 = vadd.f32 %v2246, %v2424
    %v2426 = vpop.f32.mrb[0].mxu0
    %v2427 = vpop.f32.mrb[0].mxu0
    %v2428 = vadd.f32 %v2246, %v2427
    %v2429 = vpop.f32.mrb[0].mxu0
    %2430 = vmatprep.mubr.bf16.mxu0 0
    %2431 = vmatmul.mubr.bf16.gmra.mrb[0].mxu0 %v2291
    %v2432 = vpop.f32.mrb[0].mxu0
    %v2433 = vadd.f32 %v2246, %v2432
    %v2434 = vpop.f32.mrb[0].mxu0
    %v2435 = vpop.f32.mrb[0].mxu0
    %v2436 = vadd.f32 %v2246, %v2435
    %v2437 = vpop.f32.mrb[0].mxu0
    %2438 = vmatprep.mubr.bf16.mxu0 0
    %2439 = vmatmul.mubr.bf16.gmra.mrb[0].mxu0 %v2294
    %v2440 = vpop.f32.mrb[0].mxu0
    %v2441 = vadd.f32 %v2246, %v2440
    %v2442 = vpop.f32.mrb[0].mxu0
    %v2443 = vpop.f32.mrb[0].mxu0
    %v2444 = vadd.f32 %v2246, %v2443
    %v2445 = vpop.f32.mrb[0].mxu0
    %2446 = vmatprep.mubr.bf16.mxu0 0
    %2447 = vmatmul.mubr.bf16.gmra.mrb[0].mxu0 %v2297
    %v2448 = vpop.f32.mrb[0].mxu0
    %v2449 = vadd.f32 %v2246, %v2448
    %v2450 = vpop.f32.mrb[0].mxu0
    %v2451 = vpop.f32.mrb[0].mxu0
    %v2452 = vadd.f32 %v2246, %v2451
    %v2453 = vpop.f32.mrb[0].mxu0
    %2454 = vmatprep.mubr.bf16.mxu0 0
    %2455 = vmatmul.mubr.bf16.gmra.mrb[0].mxu0 %v2300
    %v2456 = vpop.f32.mrb[0].mxu0
    %v2457 = vadd.f32 %v2246, %v2456
    %v2458 = vpop.f32.mrb[0].mxu0
    %v2459 = vpop.f32.mrb[0].mxu0
    %v2460 = vadd.f32 %v2246, %v2459
    %v2461 = vpop.f32.mrb[0].mxu0
    %2462 = vdwg.mxu0
    %v2463 = vmul.f32 %v2337, 0.5
    %v2464 = vmul.f32 %v2340, 0.5
    %v2465 = vmul.f32 %v2345, 0.5
    %v2466 = vmul.f32 %v2348, 0.5
    %v2467 = vmul.f32 %v2353, 0.5
    %v2468 = vmul.f32 %v2356, 0.5
    %v2469 = vmul.f32 %v2361, 0.5
    %v2470 = vmul.f32 %v2364, 0.5
    %v2471 = vmul.f32 %v2369, 0.5
    %v2472 = vmul.f32 %v2372, 0.5
    %v2473 = vmul.f32 %v2377, 0.5
    %v2474 = vmul.f32 %v2380, 0.5
    %v2475 = vmul.f32 %v2385, 0.5
    %v2476 = vmul.f32 %v2388, 0.5
    %v2477 = vmul.f32 %v2393, 0.5
    %v2478 = vmul.f32 %v2396, 0.5
    %v2479 = vmul.f32 %v2401, 0.5
    %v2480 = vmul.f32 %v2404, 0.5
    %v2481 = vmul.f32 %v2409, 0.5
    %v2482 = vmul.f32 %v2412, 0.5
    %v2483 = vmul.f32 %v2417, 0.5
    %v2484 = vmul.f32 %v2420, 0.5
    %v2485 = vmul.f32 %v2425, 0.5
    %v2486 = vmul.f32 %v2428, 0.5
    %v2487 = vmul.f32 %v2433, 0.5
    %v2488 = vmul.f32 %v2436, 0.5
    %v2489 = vmul.f32 %v2441, 0.5
    %v2490 = vmul.f32 %v2444, 0.5
    %v2491 = vmul.f32 %v2449, 0.5
    %v2492 = vmul.f32 %v2452, 0.5
    %v2493 = vmul.f32 %v2457, 0.5
    %v2494 = vmul.f32 %v2460, 0.5
    %v2495 = vmul.f32 %v2337, 0.70710677
    %v2496 = vmul.f32 %v2340, 0.70710677
    %v2497 = vmul.f32 %v2345, 0.70710677
    %v2498 = vmul.f32 %v2348, 0.70710677
    %v2499 = vmul.f32 %v2353, 0.70710677
    %v2500 = vmul.f32 %v2356, 0.70710677
    %v2501 = vmul.f32 %v2361, 0.70710677
    %v2502 = vmul.f32 %v2364, 0.70710677
    %v2503 = vmul.f32 %v2369, 0.70710677
    %v2504 = vmul.f32 %v2372, 0.70710677
    %v2505 = vmul.f32 %v2377, 0.70710677
    %v2506 = vmul.f32 %v2380, 0.70710677
    %v2507 = vmul.f32 %v2385, 0.70710677
    %v2508 = vmul.f32 %v2388, 0.70710677
    %v2509 = vmul.f32 %v2393, 0.70710677
    %v2510 = vmul.f32 %v2396, 0.70710677
    %v2511 = vmul.f32 %v2401, 0.70710677
    %v2512 = vmul.f32 %v2404, 0.70710677
    %v2513 = vmul.f32 %v2409, 0.70710677
    %v2514 = vmul.f32 %v2412, 0.70710677
    %v2515 = vmul.f32 %v2417, 0.70710677
    %v2516 = vmul.f32 %v2420, 0.70710677
    %v2517 = vmul.f32 %v2425, 0.70710677
    %v2518 = vmul.f32 %v2428, 0.70710677
    %v2519 = vmul.f32 %v2433, 0.70710677
    %v2520 = vmul.f32 %v2436, 0.70710677
    %v2521 = vmul.f32 %v2441, 0.70710677
    %v2522 = vmul.f32 %v2444, 0.70710677
    %v2523 = vmul.f32 %v2449, 0.70710677
    %v2524 = vmul.f32 %v2452, 0.70710677
    %v2525 = vmul.f32 %v2457, 0.70710677
    %v2526 = vmul.f32 %v2460, 0.70710677
    %v2527 = verf.f32.pop %v2495
    %v2528 = verf.f32.pop %v2496
    %v2529 = verf.f32.pop %v2497
    %v2530 = verf.f32.pop %v2498
    %v2531 = verf.f32.pop %v2499
    %v2532 = verf.f32.pop %v2500
    %v2533 = verf.f32.pop %v2501
    %v2534 = verf.f32.pop %v2502
    %v2535 = verf.f32.pop %v2503
    %v2536 = verf.f32.pop %v2504
    %v2537 = verf.f32.pop %v2505
    %v2538 = verf.f32.pop %v2506
    %v2539 = verf.f32.pop %v2507
    %v2540 = verf.f32.pop %v2508
    %v2541 = verf.f32.pop %v2509
    %v2542 = verf.f32.pop %v2510
    %v2543 = verf.f32.pop %v2511
    %v2544 = verf.f32.pop %v2512
    %v2545 = verf.f32.pop %v2513
    %v2546 = verf.f32.pop %v2514
    %v2547 = verf.f32.pop %v2515
    %v2548 = verf.f32.pop %v2516
    %v2549 = verf.f32.pop %v2517
    %v2550 = verf.f32.pop %v2518
    %v2551 = verf.f32.pop %v2519
    %v2552 = verf.f32.pop %v2520
    %v2553 = verf.f32.pop %v2521
    %v2554 = verf.f32.pop %v2522
    %v2555 = verf.f32.pop %v2523
    %v2556 = verf.f32.pop %v2524
    %v2557 = verf.f32.pop %v2525
    %v2558 = verf.f32.pop %v2526
    %v2559 = vadd.f32 %v2527, 1.0
    %v2560 = vadd.f32 %v2528, 1.0
    %v2561 = vadd.f32 %v2529, 1.0
    %v2562 = vadd.f32 %v2530, 1.0
    %v2563 = vadd.f32 %v2531, 1.0
    %v2564 = vadd.f32 %v2532, 1.0
    %v2565 = vadd.f32 %v2533, 1.0
    %v2566 = vadd.f32 %v2534, 1.0
    %v2567 = vadd.f32 %v2535, 1.0
    %v2568 = vadd.f32 %v2536, 1.0
    %v2569 = vadd.f32 %v2537, 1.0
    %v2570 = vadd.f32 %v2538, 1.0
    %v2571 = vadd.f32 %v2539, 1.0
    %v2572 = vadd.f32 %v2540, 1.0
    %v2573 = vadd.f32 %v2541, 1.0
    %v2574 = vadd.f32 %v2542, 1.0
    %v2575 = vadd.f32 %v2543, 1.0
    %v2576 = vadd.f32 %v2544, 1.0
    %v2577 = vadd.f32 %v2545, 1.0
    %v2578 = vadd.f32 %v2546, 1.0
    %v2579 = vadd.f32 %v2547, 1.0
    %v2580 = vadd.f32 %v2548, 1.0
    %v2581 = vadd.f32 %v2549, 1.0
    %v2582 = vadd.f32 %v2550, 1.0
    %v2583 = vadd.f32 %v2551, 1.0
    %v2584 = vadd.f32 %v2552, 1.0
    %v2585 = vadd.f32 %v2553, 1.0
    %v2586 = vadd.f32 %v2554, 1.0
    %v2587 = vadd.f32 %v2555, 1.0
    %v2588 = vadd.f32 %v2556, 1.0
    %v2589 = vadd.f32 %v2557, 1.0
    %v2590 = vadd.f32 %v2558, 1.0
    %v2591 = vmul.f32 %v2463, %v2559
    %v2592 = vmul.f32 %v2464, %v2560
    %v2593 = vmul.f32 %v2465, %v2561
    %v2594 = vmul.f32 %v2466, %v2562
    %v2595 = vmul.f32 %v2467, %v2563
    %v2596 = vmul.f32 %v2468, %v2564
    %v2597 = vmul.f32 %v2469, %v2565
    %v2598 = vmul.f32 %v2470, %v2566
    %v2599 = vmul.f32 %v2471, %v2567
    %v2600 = vmul.f32 %v2472, %v2568
    %v2601 = vmul.f32 %v2473, %v2569
    %v2602 = vmul.f32 %v2474, %v2570
    %v2603 = vmul.f32 %v2475, %v2571
    %v2604 = vmul.f32 %v2476, %v2572
    %v2605 = vmul.f32 %v2477, %v2573
    %v2606 = vmul.f32 %v2478, %v2574
    %v2607 = vmul.f32 %v2479, %v2575
    %v2608 = vmul.f32 %v2480, %v2576
    %v2609 = vmul.f32 %v2481, %v2577
    %v2610 = vmul.f32 %v2482, %v2578
    %v2611 = vmul.f32 %v2483, %v2579
    %v2612 = vmul.f32 %v2484, %v2580
    %v2613 = vmul.f32 %v2485, %v2581
    %v2614 = vmul.f32 %v2486, %v2582
    %v2615 = vmul.f32 %v2487, %v2583
    %v2616 = vmul.f32 %v2488, %v2584
    %v2617 = vmul.f32 %v2489, %v2585
    %v2618 = vmul.f32 %v2490, %v2586
    %v2619 = vmul.f32 %v2491, %v2587
    %v2620 = vmul.f32 %v2492, %v2588
    %v2621 = vmul.f32 %v2493, %v2589
    %v2622 = vmul.f32 %v2494, %v2590
    %v2623 = vpack.c.bf16 %v71, %v71
    %v2624 = vpack.c.bf16 %v2592, %v2591
    %v2625 = vpack.c.bf16 %v2594, %v2593
    %v2626 = vpack.c.bf16 %v2596, %v2595
    %v2627 = vpack.c.bf16 %v2598, %v2597
    %v2628 = vpack.c.bf16 %v2600, %v2599
    %v2629 = vpack.c.bf16 %v2602, %v2601
    %v2630 = vpack.c.bf16 %v2604, %v2603
    %v2631 = vpack.c.bf16 %v2606, %v2605
    %v2632 = vpack.c.bf16 %v2608, %v2607
    %v2633 = vpack.c.bf16 %v2610, %v2609
    %v2634 = vpack.c.bf16 %v2612, %v2611
    %v2635 = vpack.c.bf16 %v2614, %v2613
    %v2636 = vpack.c.bf16 %v2616, %v2615
    %v2637 = vpack.c.bf16 %v2618, %v2617
    %v2638 = vpack.c.bf16 %v2620, %v2619
    %v2639 = vpack.c.bf16 %v2622, %v2621
    %2641 = vset.pattern.permute.xlu0 0
    %2642 = vperm.xlu0 %2641, %v71
    %v2643 = vpop.permute.xlu0 %2642
    %v2645 = vshrl.u32 %v2623, 16
    %v2647 = vrot.slane %v2645, 1
    %v2648 = vrot.slane %v2643, 4
    %vm2650 = vcmask 64512
    %v2652 = vsel %vm2650, %v2647, 0
    %v2655 = vsel %vm2650, %v2624, 0
    %v2658 = vsel %vm2650, %v2625, 0
    %v2661 = vsel %vm2650, %v2626, 0
    %v2664 = vsel %vm2650, %v2627, 0
    %v2667 = vsel %vm2650, %v2628, 0
    %v2670 = vsel %vm2650, %v2629, 0
    %v2673 = vsel %vm2650, %v2630, 0
    %v2676 = vsel %vm2650, %v2631, 0
    %v2679 = vsel %vm2650, %v2632, 0
    %v2682 = vsel %vm2650, %v2633, 0
    %v2685 = vsel %vm2650, %v2634, 0
    %v2688 = vsel %vm2650, %v2635, 0
    %v2691 = vsel %vm2650, %v2636, 0
    %v2694 = vsel %vm2650, %v2637, 0
    %v2697 = vsel %vm2650, %v2638, 0
    %v2700 = vsel %vm2650, %v2639, 0
    %2702 = vmatprep.subr.bf16.mxu0 0
    %2703 = vmatpush1.bf16.xpose.msra.mxu0 %v2655
    %2704 = vmatprep.subr.bf16.mxu0 0
    %2705 = vmatpush1.bf16.xpose.msra.mxu0 %v2658
    %2706 = vmatprep.subr.bf16.mxu0 0
    %2707 = vmatpush1.bf16.xpose.msra.mxu0 %v2661
    %2708 = vmatprep.subr.bf16.mxu0 0
    %2709 = vmatpush1.bf16.xpose.msra.mxu0 %v2664
    %2710 = vmatprep.subr.bf16.mxu0 0
    %2711 = vmatpush1.bf16.xpose.msra.mxu0 %v2667
    %2712 = vmatprep.subr.bf16.mxu0 0
    %2713 = vmatpush1.bf16.xpose.msra.mxu0 %v2670
    %2714 = vmatprep.subr.bf16.mxu0 0
    %2715 = vmatpush1.bf16.xpose.msra.mxu0 %v2673
    %2716 = vmatprep.subr.bf16.mxu0 0
    %2717 = vmatpush1.bf16.xpose.msra.mxu0 %v2676
    %2718 = vmatprep.subr.bf16.mxu0 0
    %2719 = vmatpush1.bf16.xpose.msra.mxu0 %v2679
    %2720 = vmatprep.subr.bf16.mxu0 0
    %2721 = vmatpush1.bf16.xpose.msra.mxu0 %v2682
    %2722 = vmatprep.subr.bf16.mxu0 0
    %2723 = vmatpush1.bf16.xpose.msra.mxu0 %v2685
    %2724 = vmatprep.subr.bf16.mxu0 0
    %2725 = vmatpush1.bf16.xpose.msra.mxu0 %v2688
    %2726 = vmatprep.subr.bf16.mxu0 0
    %2727 = vmatpush1.bf16.xpose.msra.mxu0 %v2691
    %2728 = vmatprep.subr.bf16.mxu0 0
    %2729 = vmatpush1.bf16.xpose.msra.mxu0 %v2694
    %2730 = vmatprep.subr.bf16.mxu0 0
    %2731 = vmatpush1.bf16.xpose.msra.mxu0 %v2697
    %2732 = vmatprep.subr.bf16.mxu0 0
    %2733 = vmatpush1.bf16.xpose.msra.mxu0 %v2700
    %2734 = vmatprep.mubr.bf16.mxu0 0
    %2735 = vmatmul.mubr.bf16.gmra.mrb[0].mxu0 %v2652
    %v2736 = vpop.f32.mrb[0].mxu0
    %v2737 = vadd.f32 %v2648, %v2736
    %v2738 = vpop.f32.mrb[0].mxu0
    %v2739 = vadd.f32 %v2648, %v2738
    %v2740 = vpop.f32.mrb[0].mxu0
    %v2741 = vpop.f32.mrb[0].mxu0
    %2742 = vdwg.mxu0
    %v2743 = vlaneseq
    %v2744 = vshrl.u32 %v2743, 7
    %v2745 = vsub.s32 0, %v2744
    %v2746 = vrot.slane %v2737, %v2745
    %v2747 = vlaneseq
    %v2748 = vshrl.u32 %v2747, 7
    %v2749 = vsub.s32 0, %v2748
    %v2750 = vrot.slane %v2739, %v2749
    %2751 = vst [vmem:[%s6] sm:$0xff] %v2746
    %2752 = vst [vmem:[%s6 + $0x8] sm:$0xff] %v2750
    // Predicated region
    $region30: #{mask_predictor.1} parent=1 // pred_check
      _
    $region31: #{mask_predictor.1} parent=1 // pred_check_branch
      %2754 = sbr.rel (0) target = $region33
    $region32: #{mask_predictor.1} parent=1 // pred_region
      _
    $region33: #{mask_predictor.1} parent=1 // pred_fallthru
      _
    // Predicated region
    $region34: #{mask_predictor.1} parent=1 // pred_check
      _
    $region35: #{mask_predictor.1} parent=1 // pred_check_branch
      %2756 = sbr.rel (0) target = $region37
    $region36: #{mask_predictor.1} parent=1 // pred_region
      _
    $region37: #{mask_predictor.1} parent=1 // pred_fallthru
      _
    %2757 = vsyncpa [#allocation3], 1

</llo_original>
